<compile_context>
chip_gen: v7x
topology: tpu7x:2x2x1
jax: 0.10.0
libtpu: 0.0.40
codegen_flags: <defaults>
</compile_context>

<pallas_src>
import jax
import jax.numpy as jnp
from jax.experimental import pallas as pl
from jax.experimental.pallas import tpu as pltpu

# Small synthetic config (roberta-like, shrunk).
B, S, H = 2, 8, 32          # batch, seq len, hidden
NH, HD = 2, 16              # heads, head dim (NH*HD == H)
FF = 64                     # FFN intermediate
VOCAB = 64
NLAYERS = 2
LN_EPS = 1e-12


def _layernorm(x, g, b):
    mu = jnp.mean(x, axis=-1, keepdims=True)
    var = jnp.mean((x - mu) ** 2, axis=-1, keepdims=True)
    return (x - mu) * jax.lax.rsqrt(var + LN_EPS) * g + b


# ------------------------------------------------------------- fused kernel ---

def fused_encoder_kernel(mask_ref, x_emb_ref, eg_ref, eb_ref,
                         wq_ref, bq_ref, wk_ref, bk_ref, wv_ref, bv_ref,
                         wo_ref, bo_ref, ln1g_ref, ln1b_ref,
                         w1_ref, b1_ref, w2_ref, b2_ref, ln2g_ref, ln2b_ref,
                         o_ref, x_sc):
    l = pl.program_id(0)

    # Layer 0: embedding LayerNorm into the resident activation scratch.
    @pl.when(l == 0)
    def _():
        x_sc[...] = _layernorm(x_emb_ref[...].astype(jnp.float32),
                               eg_ref[...], eb_ref[...])

    mask = mask_ref[...]                          # (B, S) float32 {0,1}
    madd = (mask - 1.0) * 1e9                     # additive key mask
    madd_b = madd[:, None, :]                     # (B, 1, S), hoisted once

    x = x_sc[...]                                 # (B, S, H) f32
    x_bf = x.astype(jnp.bfloat16)
    x2d = x_bf.reshape(B * S, H)                  # lane-contiguous 2D operand

    scale = 1.0 / jnp.sqrt(jnp.float32(HD))
    attn2d = jnp.zeros((B * S, H), jnp.float32)

    # Static unroll over heads; weights are pre-split per head so there are no
    # lane-axis slices and no concatenate (output projection is accumulated).
    for h in range(NH):
        qh = (jnp.dot(x2d, wq_ref[h], preferred_element_type=jnp.float32)
              + bq_ref[h]).reshape(B, S, HD)
        kh = (jnp.dot(x2d, wk_ref[h], preferred_element_type=jnp.float32)
              + bk_ref[h]).reshape(B, S, HD)
        vh = (jnp.dot(x2d, wv_ref[h], preferred_element_type=jnp.float32)
              + bv_ref[h]).reshape(B, S, HD)

        s = jnp.einsum('bqd,bkd->bqk',
                       qh.astype(jnp.bfloat16), kh.astype(jnp.bfloat16),
                       preferred_element_type=jnp.float32) * scale + madd_b
        s = s - jnp.max(s, axis=-1, keepdims=True)
        p = jnp.exp(s)
        p = p * pl.reciprocal(jnp.sum(p, axis=-1, keepdims=True), approx=True)

        ctx = jnp.einsum('bqk,bkd->bqd',
                         p.astype(jnp.bfloat16), vh.astype(jnp.bfloat16),
                         preferred_element_type=jnp.float32)     # (B, S, HD)
        attn2d = attn2d + jnp.dot(
            ctx.reshape(B * S, HD).astype(jnp.bfloat16), wo_ref[h],
            preferred_element_type=jnp.float32)

    attn = attn2d.reshape(B, S, H) + bo_ref[...]
    x1 = _layernorm(x + attn, ln1g_ref[...], ln1b_ref[...])

    h1 = jnp.dot(x1.reshape(B * S, H).astype(jnp.bfloat16), w1_ref[...],
                 preferred_element_type=jnp.float32) + b1_ref[...]
    # TODO(synk): roberta uses exact (erf) GELU; tanh approximation kept here
    # for guaranteed Mosaic lowering (small numerical deviation).
    h1 = jax.nn.gelu(h1, approximate=True)
    ffn = (jnp.dot(h1.astype(jnp.bfloat16), w2_ref[...],
                   preferred_element_type=jnp.float32)
           + b2_ref[...]).reshape(B, S, H)
    x2 = _layernorm(x1 + ffn, ln2g_ref[...], ln2b_ref[...])
    x_sc[...] = x2

    # Last layer: masked mean pooling -> sentence embedding.
    @pl.when(l == pl.num_programs(0) - 1)
    def _():
        num = jnp.sum(x2 * mask[:, :, None], axis=1)              # (B, H)
        den = jnp.maximum(jnp.sum(mask, axis=1, keepdims=True), 1e-9)
        o_ref[...] = (num * pl.reciprocal(den, approx=True)).astype(o_ref.dtype)


# ----------------------------------------------------------------- wrapper ---

def _full_spec(shape):
    n = len(shape)
    return pl.BlockSpec(tuple(shape), lambda l, _n=n: (0,) * _n)


def _layer_spec(shape):
    n = len(shape) - 1
    return pl.BlockSpec((None,) + tuple(shape[1:]),
                        lambda l, _n=n: (l,) + (0,) * _n)


def stransformer_forward(kp, input_ids, attention_mask):
    """Mimics STransformerInputLayer.forward -> sentence_embedding (B, H)."""
    # Glue: embedding gather + learned positional embedding (XLA level).
    # TODO(synk): at real vocab scale, fold the gather into the kernel via
    # PrefetchScalarGridSpec scalar-prefetched ids + per-row blocks.
    x_emb = jnp.take(kp['word_emb'], input_ids, axis=0) + kp['pos_emb'][None]

    stacked_names = ['wq', 'bq', 'wk', 'bk', 'wv', 'bv', 'wo', 'bo',
                     'ln1g', 'ln1b', 'w1', 'b1', 'w2', 'b2', 'ln2g', 'ln2b']
    stacked = [kp[n] for n in stacked_names]

    in_specs = ([_full_spec(attention_mask.shape),
                 _full_spec(x_emb.shape),
                 _full_spec(kp['emb_ln_g'].shape),
                 _full_spec(kp['emb_ln_b'].shape)]
                + [_layer_spec(a.shape) for a in stacked])

    grid_spec = pltpu.PrefetchScalarGridSpec(
        num_scalar_prefetch=0,
        grid=(NLAYERS,),
        in_specs=in_specs,
        out_specs=pl.BlockSpec((B, H), lambda l: (0, 0)),
        scratch_shapes=[pltpu.VMEM((B, S, H), jnp.float32)],
    )
    return pl.pallas_call(
        fused_encoder_kernel,
        out_shape=jax.ShapeDtypeStruct((B, H), jnp.float32),
        grid_spec=grid_spec,
        compiler_params=pltpu.CompilerParams(
            dimension_semantics=("arbitrary",)),   # layer axis carries state
    )(attention_mask, x_emb, kp['emb_ln_g'], kp['emb_ln_b'], *stacked)


# ------------------------------------------------------ params & reference ---

def init_params(key):
    def nrm(k, shape):
        return (0.02 * jax.random.normal(k, shape)).astype(jnp.float32)

    ks = jax.random.split(key, 2 + NLAYERS)
    params = dict(
        word_emb=nrm(ks[0], (VOCAB, H)),
        pos_emb=nrm(ks[1], (S, H)),
        emb_ln_g=jnp.ones((1, H), jnp.float32),
        emb_ln_b=jnp.zeros((1, H), jnp.float32),
        layers=[],
    )
    for i in range(NLAYERS):
        lk = jax.random.split(ks[2 + i], 6)
        params['layers'].append(dict(
            wq=nrm(lk[0], (H, H)),  bq=jnp.zeros((1, H), jnp.float32),
            wk=nrm(lk[1], (H, H)),  bk=jnp.zeros((1, H), jnp.float32),
            wv=nrm(lk[2], (H, H)),  bv=jnp.zeros((1, H), jnp.float32),
            wo=nrm(lk[3], (H, H)),  bo=jnp.zeros((1, H), jnp.float32),
            ln1g=jnp.ones((1, H), jnp.float32), ln1b=jnp.zeros((1, H), jnp.float32),
            w1=nrm(lk[4], (H, FF)), b1=jnp.zeros((1, FF), jnp.float32),
            w2=nrm(lk[5], (FF, H)), b2=jnp.zeros((1, H), jnp.float32),
            ln2g=jnp.ones((1, H), jnp.float32), ln2b=jnp.zeros((1, H), jnp.float32),
        ))
    return params


def pack_params_for_kernel(params):
    """Stack per-layer weights along a leading NLAYERS dim, split attention
    weights per head, and cast matmul weights to bf16 (MXU operands)."""
    L = params['layers']

    def stack(fn, dtype=None):
        a = jnp.stack([fn(lp) for lp in L], axis=0)
        return a.astype(dtype) if dtype is not None else a

    def split_cols(w):    # (H, H) -> (NH, H, HD): head h = columns h*HD:(h+1)*HD
        return jnp.transpose(w.reshape(H, NH, HD), (1, 0, 2))

    def split_bias(b):    # (1, H) -> (NH, 1, HD)
        return jnp.transpose(b.reshape(1, NH, HD), (1, 0, 2))

    def split_rows(w):    # (H, H) -> (NH, HD, H): head h = rows h*HD:(h+1)*HD
        return w.reshape(NH, HD, H)

    bf = jnp.bfloat16
    return dict(
        word_emb=params['word_emb'], pos_emb=params['pos_emb'],
        emb_ln_g=params['emb_ln_g'], emb_ln_b=params['emb_ln_b'],
        wq=stack(lambda lp: split_cols(lp['wq']), bf),
        bq=stack(lambda lp: split_bias(lp['bq'])),
        wk=stack(lambda lp: split_cols(lp['wk']), bf),
        bk=stack(lambda lp: split_bias(lp['bk'])),
        wv=stack(lambda lp: split_cols(lp['wv']), bf),
        bv=stack(lambda lp: split_bias(lp['bv'])),
        wo=stack(lambda lp: split_rows(lp['wo']), bf),
        bo=stack(lambda lp: lp['bo']),
        ln1g=stack(lambda lp: lp['ln1g']), ln1b=stack(lambda lp: lp['ln1b']),
        w1=stack(lambda lp: lp['w1'], bf), b1=stack(lambda lp: lp['b1']),
        w2=stack(lambda lp: lp['w2'], bf), b2=stack(lambda lp: lp['b2']),
        ln2g=stack(lambda lp: lp['ln2g']), ln2b=stack(lambda lp: lp['ln2b']),
    )


def reference_forward(params, input_ids, attention_mask):
    """Pure-JAX reference (standard full-matrix MHA) mirroring the kernel's
    bf16 matmul operands, used to validate the head-split packing."""
    def bf(a):
        return a.astype(jnp.bfloat16)

    def lin(t, w, b):
        t2 = bf(t).reshape(-1, t.shape[-1])
        y = jnp.dot(t2, bf(w), preferred_element_type=jnp.float32)
        return y.reshape(t.shape[:-1] + (w.shape[1],)) + b

    x = jnp.take(params['word_emb'], input_ids, axis=0) + params['pos_emb'][None]
    x = _layernorm(x, params['emb_ln_g'], params['emb_ln_b'])
    madd = (attention_mask - 1.0) * 1e9
    scale = 1.0 / jnp.sqrt(jnp.float32(HD))
    for lp in params['layers']:
        q = lin(x, lp['wq'], lp['bq'])
        k = lin(x, lp['wk'], lp['bk'])
        v = lin(x, lp['wv'], lp['bv'])
        qh = q.reshape(B, S, NH, HD).transpose(0, 2, 1, 3)
        kh = k.reshape(B, S, NH, HD).transpose(0, 2, 1, 3)
        vh = v.reshape(B, S, NH, HD).transpose(0, 2, 1, 3)
        s = jnp.einsum('bhqd,bhkd->bhqk', bf(qh), bf(kh),
                       preferred_element_type=jnp.float32) * scale
        s = s + madd[:, None, None, :]
        p = jax.nn.softmax(s, axis=-1)
        ctx = jnp.einsum('bhqk,bhkd->bhqd', bf(p), bf(vh),
                         preferred_element_type=jnp.float32)
        ctx = ctx.transpose(0, 2, 1, 3).reshape(B, S, H)
        attn = lin(ctx, lp['wo'], lp['bo'])
        x1 = _layernorm(x + attn, lp['ln1g'], lp['ln1b'])
        h1 = jax.nn.gelu(lin(x1, lp['w1'], lp['b1']), approximate=True)
        ffn = lin(h1, lp['w2'], lp['b2'])
        x = _layernorm(x1 + ffn, lp['ln2g'], lp['ln2b'])
    num = jnp.sum(x * attention_mask[:, :, None], axis=1)
    den = jnp.maximum(jnp.sum(attention_mask, axis=1, keepdims=True), 1e-9)
    return num / den


if __name__ == "__main__":
    key = jax.random.PRNGKey(0)
    pkey, ikey = jax.random.split(key)

    # TODO(synk): real module loads pretrained roberta-base weights via
    # sentence_transformers; here the encoder uses deterministic synthetic params.
    params = init_params(pkey)
    kparams = pack_params_for_kernel(params)   # packed once, reused per call

    input_ids = jax.random.randint(ikey, (B, S), 0, VOCAB, dtype=jnp.int32)
    attention_mask = jnp.array(
        [[1, 1, 1, 1, 1, 1, 1, 1],
         [1, 1, 1, 1, 1, 0, 0, 0]], dtype=jnp.float32)

    sentence_embedding = stransformer_forward(kparams, input_ids, attention_mask)
    sentence_embedding = jax.block_until_ready(sentence_embedding)

    ref = jax.block_until_ready(reference_forward(params, input_ids, attention_mask))

    assert sentence_embedding.shape == (B, H)
    assert sentence_embedding.dtype == jnp.float32
    assert bool(jnp.all(jnp.isfinite(sentence_embedding)))
    assert bool(jnp.allclose(sentence_embedding, ref, atol=3e-2, rtol=3e-2))
    print("KERNEL_OK")
</pallas_src>

<mosaic_0001>
module attributes {stable_mosaic.version = 11 : i64} {
  func.func @fused_encoder_kernel(%arg0: i32, %arg1: memref<2x8xf32, #tpu.memory_space<vmem>>, %arg2: memref<2x8x32xf32, #tpu.memory_space<vmem>>, %arg3: memref<1x32xf32, #tpu.memory_space<vmem>>, %arg4: memref<1x32xf32, #tpu.memory_space<vmem>>, %arg5: memref<1x2x32x16xbf16, #tpu.memory_space<vmem>>, %arg6: memref<1x2x1x16xf32, #tpu.memory_space<vmem>>, %arg7: memref<1x2x32x16xbf16, #tpu.memory_space<vmem>>, %arg8: memref<1x2x1x16xf32, #tpu.memory_space<vmem>>, %arg9: memref<1x2x32x16xbf16, #tpu.memory_space<vmem>>, %arg10: memref<1x2x1x16xf32, #tpu.memory_space<vmem>>, %arg11: memref<1x2x16x32xbf16, #tpu.memory_space<vmem>>, %arg12: memref<1x1x32xf32, #tpu.memory_space<vmem>>, %arg13: memref<1x1x32xf32, #tpu.memory_space<vmem>>, %arg14: memref<1x1x32xf32, #tpu.memory_space<vmem>>, %arg15: memref<1x32x64xbf16, #tpu.memory_space<vmem>>, %arg16: memref<1x1x64xf32, #tpu.memory_space<vmem>>, %arg17: memref<1x64x32xbf16, #tpu.memory_space<vmem>>, %arg18: memref<1x1x32xf32, #tpu.memory_space<vmem>>, %arg19: memref<1x1x32xf32, #tpu.memory_space<vmem>>, %arg20: memref<1x1x32xf32, #tpu.memory_space<vmem>>, %arg21: memref<2x32xf32, #tpu.memory_space<vmem>>, %arg22: memref<2x8x32xf32, #tpu.memory_space<vmem>>) attributes {dimension_semantics = [#tpu.dimension_semantics<arbitrary>], iteration_bounds = array<i64: 2>, scalar_prefetch = 0 : i64, scratch_operands = 1 : i64, tpu.core_type = #tpu.core_type<tc>, window_params = [{pipeline_mode = #tpu.pipeline_mode<synchronous>, transform_indices = @transform_0, window_bounds = array<i64: 2, 8>}, {pipeline_mode = #tpu.pipeline_mode<synchronous>, transform_indices = @transform_1, window_bounds = array<i64: 2, 8, 32>}, {pipeline_mode = #tpu.pipeline_mode<synchronous>, transform_indices = @transform_2, window_bounds = array<i64: 1, 32>}, {pipeline_mode = #tpu.pipeline_mode<synchronous>, transform_indices = @transform_3, window_bounds = array<i64: 1, 32>}, {transform_indices = @transform_4, window_bounds = array<i64: 1, 2, 32, 16>}, {transform_indices = @transform_5, window_bounds = array<i64: 1, 2, 1, 16>}, {transform_indices = @transform_6, window_bounds = array<i64: 1, 2, 32, 16>}, {transform_indices = @transform_7, window_bounds = array<i64: 1, 2, 1, 16>}, {transform_indices = @transform_8, window_bounds = array<i64: 1, 2, 32, 16>}, {transform_indices = @transform_9, window_bounds = array<i64: 1, 2, 1, 16>}, {transform_indices = @transform_10, window_bounds = array<i64: 1, 2, 16, 32>}, {transform_indices = @transform_11, window_bounds = array<i64: 1, 1, 32>}, {transform_indices = @transform_12, window_bounds = array<i64: 1, 1, 32>}, {transform_indices = @transform_13, window_bounds = array<i64: 1, 1, 32>}, {transform_indices = @transform_14, window_bounds = array<i64: 1, 32, 64>}, {transform_indices = @transform_15, window_bounds = array<i64: 1, 1, 64>}, {transform_indices = @transform_16, window_bounds = array<i64: 1, 64, 32>}, {transform_indices = @transform_17, window_bounds = array<i64: 1, 1, 32>}, {transform_indices = @transform_18, window_bounds = array<i64: 1, 1, 32>}, {transform_indices = @transform_19, window_bounds = array<i64: 1, 1, 32>}, {pipeline_mode = #tpu.pipeline_mode<synchronous>, transform_indices = @transform_20, window_bounds = array<i64: 2, 32>}]} {
    %c0_i32 = arith.constant 0 : i32
    %0 = arith.cmpi eq, %arg0, %c0_i32 : i32
    %1 = arith.extui %0 : i1 to i32
    %c0_i32_0 = arith.constant 0 : i32
    %2 = arith.cmpi ne, %1, %c0_i32_0 : i32
    scf.if %2 {
      %c0_127 = arith.constant 0 : index
      %c0_128 = arith.constant 0 : index
      %c0_129 = arith.constant 0 : index
      %214 = vector.load %arg2[%c0_127, %c0_128, %c0_129] : memref<2x8x32xf32, #tpu.memory_space<vmem>>, vector<2x8x32xf32>
      %c0_130 = arith.constant 0 : index
      %c0_131 = arith.constant 0 : index
      %215 = vector.load %arg3[%c0_130, %c0_131] : memref<1x32xf32, #tpu.memory_space<vmem>>, vector<1x32xf32>
      %c0_132 = arith.constant 0 : index
      %c0_133 = arith.constant 0 : index
      %216 = vector.load %arg4[%c0_132, %c0_133] : memref<1x32xf32, #tpu.memory_space<vmem>>, vector<1x32xf32>
      %cst_134 = arith.constant dense<0.000000e+00> : vector<2x8xf32>
      %217 = vector.multi_reduction <add>, %214, %cst_134 [2] : vector<2x8x32xf32> to vector<2x8xf32>
      %218 = vector.shape_cast %217 : vector<2x8xf32> to vector<2x8x1xf32>
      %cst_135 = arith.constant 3.200000e+01 : f32
      %219 = vector.broadcast %cst_135 : f32 to vector<2x8x1xf32>
      %220 = arith.divf %218, %219 : vector<2x8x1xf32>
      %221 = vector.broadcast %220 : vector<2x8x1xf32> to vector<2x8x32xf32>
      %222 = arith.subf %214, %221 : vector<2x8x32xf32>
      %223 = arith.mulf %222, %222 : vector<2x8x32xf32>
      %cst_136 = arith.constant dense<0.000000e+00> : vector<2x8xf32>
      %224 = vector.multi_reduction <add>, %223, %cst_136 [2] : vector<2x8x32xf32> to vector<2x8xf32>
      %225 = vector.shape_cast %224 : vector<2x8xf32> to vector<2x8x1xf32>
      %cst_137 = arith.constant 3.200000e+01 : f32
      %226 = vector.broadcast %cst_137 : f32 to vector<2x8x1xf32>
      %227 = arith.divf %225, %226 : vector<2x8x1xf32>
      %228 = vector.broadcast %220 : vector<2x8x1xf32> to vector<2x8x32xf32>
      %229 = arith.subf %214, %228 : vector<2x8x32xf32>
      %cst_138 = arith.constant 9.99999996E-13 : f32
      %230 = vector.broadcast %cst_138 : f32 to vector<2x8x1xf32>
      %231 = arith.addf %227, %230 : vector<2x8x1xf32>
      %232 = math.rsqrt %231 : vector<2x8x1xf32>
      %233 = vector.broadcast %232 : vector<2x8x1xf32> to vector<2x8x32xf32>
      %234 = arith.mulf %229, %233 : vector<2x8x32xf32>
      %235 = vector.shape_cast %215 : vector<1x32xf32> to vector<1x1x32xf32>
      %236 = vector.broadcast %235 : vector<1x1x32xf32> to vector<2x8x32xf32>
      %237 = arith.mulf %234, %236 : vector<2x8x32xf32>
      %238 = vector.shape_cast %216 : vector<1x32xf32> to vector<1x1x32xf32>
      %239 = vector.broadcast %238 : vector<1x1x32xf32> to vector<2x8x32xf32>
      %240 = arith.addf %237, %239 : vector<2x8x32xf32>
      %c0_139 = arith.constant 0 : index
      %c0_140 = arith.constant 0 : index
      %c0_141 = arith.constant 0 : index
      %241 = vector.load %arg22[%c0_139, %c0_140, %c0_141] : memref<2x8x32xf32, #tpu.memory_space<vmem>>, vector<2x8x32xf32>
      tpu.vector_store %arg22[%c0_139, %c0_140, %c0_141], %240 {strides = array<i32>} : memref<2x8x32xf32, #tpu.memory_space<vmem>>, vector<2x8x32xf32>,
    } else {
    }
    %c0 = arith.constant 0 : index
    %c0_1 = arith.constant 0 : index
    %3 = vector.load %arg1[%c0, %c0_1] : memref<2x8xf32, #tpu.memory_space<vmem>>, vector<2x8xf32>
    %cst = arith.constant 1.000000e+00 : f32
    %4 = vector.broadcast %cst : f32 to vector<2x8xf32>
    %5 = arith.subf %3, %4 : vector<2x8xf32>
    %cst_2 = arith.constant 1.000000e+09 : f32
    %6 = vector.broadcast %cst_2 : f32 to vector<2x8xf32>
    %7 = arith.mulf %5, %6 : vector<2x8xf32>
    %8 = vector.shape_cast %7 : vector<2x8xf32> to vector<2x1x8xf32>
    %c0_3 = arith.constant 0 : index
    %c0_4 = arith.constant 0 : index
    %c0_5 = arith.constant 0 : index
    %9 = vector.load %arg22[%c0_3, %c0_4, %c0_5] : memref<2x8x32xf32, #tpu.memory_space<vmem>>, vector<2x8x32xf32>
    %10 = arith.truncf %9 : vector<2x8x32xf32> to vector<2x8x32xbf16>
    %11 = vector.shape_cast %10 : vector<2x8x32xbf16> to vector<16x32xbf16>
    %cst_6 = arith.constant 1.600000e+01 : f32
    %12 = math.sqrt %cst_6 : f32
    %cst_7 = arith.constant 1.000000e+00 : f32
    %13 = arith.divf %cst_7, %12 : f32
    %cst_8 = arith.constant 0.000000e+00 : f32
    %14 = vector.broadcast %cst_8 : f32 to vector<16x32xf32>
    %c0_9 = arith.constant 0 : index
    %c0_10 = arith.constant 0 : index
    %c0_11 = arith.constant 0 : index
    %c0_12 = arith.constant 0 : index
    %15 = vector.load %arg5[%c0_9, %c0_10, %c0_11, %c0_12] : memref<1x2x32x16xbf16, #tpu.memory_space<vmem>>, vector<1x1x32x16xbf16>
    %16 = vector.shape_cast %15 : vector<1x1x32x16xbf16> to vector<32x16xbf16>
    %cst_13 = arith.constant dense<0.000000e+00> : vector<16x16xf32>
    %17 = tpu.matmul %11, %16, %cst_13 {dimension_numbers = #tpu.dot_dimension_numbers<[1], [0], [0], [1], [0, 0, 1, 1], [], []>} : vector<16x32xbf16>, vector<32x16xbf16>, vector<16x16xf32> -> vector<16x16xf32>
    %c0_14 = arith.constant 0 : index
    %c0_15 = arith.constant 0 : index
    %c0_16 = arith.constant 0 : index
    %c0_17 = arith.constant 0 : index
    %18 = vector.load %arg6[%c0_14, %c0_15, %c0_16, %c0_17] : memref<1x2x1x16xf32, #tpu.memory_space<vmem>>, vector<1x1x1x16xf32>
    %19 = vector.shape_cast %18 : vector<1x1x1x16xf32> to vector<1x16xf32>
    %20 = vector.broadcast %19 : vector<1x16xf32> to vector<16x16xf32>
    %21 = arith.addf %17, %20 : vector<16x16xf32>
    %22 = vector.shape_cast %21 : vector<16x16xf32> to vector<2x8x16xf32>
    %c0_18 = arith.constant 0 : index
    %c0_19 = arith.constant 0 : index
    %c0_20 = arith.constant 0 : index
    %c0_21 = arith.constant 0 : index
    %23 = vector.load %arg7[%c0_18, %c0_19, %c0_20, %c0_21] : memref<1x2x32x16xbf16, #tpu.memory_space<vmem>>, vector<1x1x32x16xbf16>
    %24 = vector.shape_cast %23 : vector<1x1x32x16xbf16> to vector<32x16xbf16>
    %cst_22 = arith.constant dense<0.000000e+00> : vector<16x16xf32>
    %25 = tpu.matmul %11, %24, %cst_22 {dimension_numbers = #tpu.dot_dimension_numbers<[1], [0], [0], [1], [0, 0, 1, 1], [], []>} : vector<16x32xbf16>, vector<32x16xbf16>, vector<16x16xf32> -> vector<16x16xf32>
    %c0_23 = arith.constant 0 : index
    %c0_24 = arith.constant 0 : index
    %c0_25 = arith.constant 0 : index
    %c0_26 = arith.constant 0 : index
    %26 = vector.load %arg8[%c0_23, %c0_24, %c0_25, %c0_26] : memref<1x2x1x16xf32, #tpu.memory_space<vmem>>, vector<1x1x1x16xf32>
    %27 = vector.shape_cast %26 : vector<1x1x1x16xf32> to vector<1x16xf32>
    %28 = vector.broadcast %27 : vector<1x16xf32> to vector<16x16xf32>
    %29 = arith.addf %25, %28 : vector<16x16xf32>
    %30 = vector.shape_cast %29 : vector<16x16xf32> to vector<2x8x16xf32>
    %c0_27 = arith.constant 0 : index
    %c0_28 = arith.constant 0 : index
    %c0_29 = arith.constant 0 : index
    %c0_30 = arith.constant 0 : index
    %31 = vector.load %arg9[%c0_27, %c0_28, %c0_29, %c0_30] : memref<1x2x32x16xbf16, #tpu.memory_space<vmem>>, vector<1x1x32x16xbf16>
    %32 = vector.shape_cast %31 : vector<1x1x32x16xbf16> to vector<32x16xbf16>
    %cst_31 = arith.constant dense<0.000000e+00> : vector<16x16xf32>
    %33 = tpu.matmul %11, %32, %cst_31 {dimension_numbers = #tpu.dot_dimension_numbers<[1], [0], [0], [1], [0, 0, 1, 1], [], []>} : vector<16x32xbf16>, vector<32x16xbf16>, vector<16x16xf32> -> vector<16x16xf32>
    %c0_32 = arith.constant 0 : index
    %c0_33 = arith.constant 0 : index
    %c0_34 = arith.constant 0 : index
    %c0_35 = arith.constant 0 : index
    %34 = vector.load %arg10[%c0_32, %c0_33, %c0_34, %c0_35] : memref<1x2x1x16xf32, #tpu.memory_space<vmem>>, vector<1x1x1x16xf32>
    %35 = vector.shape_cast %34 : vector<1x1x1x16xf32> to vector<1x16xf32>
    %36 = vector.broadcast %35 : vector<1x16xf32> to vector<16x16xf32>
    %37 = arith.addf %33, %36 : vector<16x16xf32>
    %38 = vector.shape_cast %37 : vector<16x16xf32> to vector<2x8x16xf32>
    %39 = arith.truncf %22 : vector<2x8x16xf32> to vector<2x8x16xbf16>
    %40 = arith.truncf %30 : vector<2x8x16xf32> to vector<2x8x16xbf16>
    "tpu.trace_start"() <{level = 10 : i32, message = "bqd,bkd->bqk"}> : () -> ()
    %cst_36 = arith.constant dense<0.000000e+00> : vector<2x8x8xf32>
    %41 = tpu.matmul %39, %40, %cst_36 {dimension_numbers = #tpu.dot_dimension_numbers<[2], [2], [1], [1], [0, 0, 0, 1, 1, 1], [0], [0]>} : vector<2x8x16xbf16>, vector<2x8x16xbf16>, vector<2x8x8xf32> -> vector<2x8x8xf32>
    "tpu.trace_stop"() : () -> ()
    %42 = vector.broadcast %13 : f32 to vector<2x8x8xf32>
    %43 = arith.mulf %41, %42 : vector<2x8x8xf32>
    %44 = vector.broadcast %8 : vector<2x1x8xf32> to vector<2x8x8xf32>
    %45 = arith.addf %43, %44 : vector<2x8x8xf32>
    %cst_37 = arith.constant dense<0xFF800000> : vector<2x8xf32>
    %46 = vector.multi_reduction <maximumf>, %45, %cst_37 [2] : vector<2x8x8xf32> to vector<2x8xf32>
    %47 = vector.shape_cast %46 : vector<2x8xf32> to vector<2x8x1xf32>
    %48 = vector.broadcast %47 : vector<2x8x1xf32> to vector<2x8x8xf32>
    %49 = arith.subf %45, %48 : vector<2x8x8xf32>
    %50 = math.exp %49 : vector<2x8x8xf32>
    %cst_38 = arith.constant dense<0.000000e+00> : vector<2x8xf32>
    %51 = vector.multi_reduction <add>, %50, %cst_38 [2] : vector<2x8x8xf32> to vector<2x8xf32>
    %52 = vector.shape_cast %51 : vector<2x8xf32> to vector<2x8x1xf32>
    %53 = tpu.reciprocal %52 {approx = true} : vector<2x8x1xf32> -> vector<2x8x1xf32>
    %54 = vector.broadcast %53 : vector<2x8x1xf32> to vector<2x8x8xf32>
    %55 = arith.mulf %50, %54 : vector<2x8x8xf32>
    %56 = arith.truncf %55 : vector<2x8x8xf32> to vector<2x8x8xbf16>
    %57 = arith.truncf %38 : vector<2x8x16xf32> to vector<2x8x16xbf16>
    "tpu.trace_start"() <{level = 10 : i32, message = "bqk,bkd->bqd"}> : () -> ()
    %cst_39 = arith.constant dense<0.000000e+00> : vector<2x8x16xf32>
    %58 = tpu.matmul %56, %57, %cst_39 {dimension_numbers = #tpu.dot_dimension_numbers<[2], [1], [1], [2], [0, 0, 0, 1, 1, 2], [0], [0]>} : vector<2x8x8xbf16>, vector<2x8x16xbf16>, vector<2x8x16xf32> -> vector<2x8x16xf32>
    "tpu.trace_stop"() : () -> ()
    %59 = vector.shape_cast %58 : vector<2x8x16xf32> to vector<16x16xf32>
    %60 = arith.truncf %59 : vector<16x16xf32> to vector<16x16xbf16>
    %c0_40 = arith.constant 0 : index
    %c0_41 = arith.constant 0 : index
    %c0_42 = arith.constant 0 : index
    %c0_43 = arith.constant 0 : index
    %61 = vector.load %arg11[%c0_40, %c0_41, %c0_42, %c0_43] : memref<1x2x16x32xbf16, #tpu.memory_space<vmem>>, vector<1x1x16x32xbf16>
    %62 = vector.shape_cast %61 : vector<1x1x16x32xbf16> to vector<16x32xbf16>
    %cst_44 = arith.constant dense<0.000000e+00> : vector<16x32xf32>
    %63 = tpu.matmul %60, %62, %cst_44 {dimension_numbers = #tpu.dot_dimension_numbers<[1], [0], [0], [1], [0, 0, 1, 1], [], []>} : vector<16x16xbf16>, vector<16x32xbf16>, vector<16x32xf32> -> vector<16x32xf32>
    %64 = arith.addf %14, %63 : vector<16x32xf32>
    %c0_45 = arith.constant 0 : index
    %c1 = arith.constant 1 : index
    %c0_46 = arith.constant 0 : index
    %c0_47 = arith.constant 0 : index
    %65 = vector.load %arg5[%c0_45, %c1, %c0_46, %c0_47] : memref<1x2x32x16xbf16, #tpu.memory_space<vmem>>, vector<1x1x32x16xbf16>
    %66 = vector.shape_cast %65 : vector<1x1x32x16xbf16> to vector<32x16xbf16>
    %cst_48 = arith.constant dense<0.000000e+00> : vector<16x16xf32>
    %67 = tpu.matmul %11, %66, %cst_48 {dimension_numbers = #tpu.dot_dimension_numbers<[1], [0], [0], [1], [0, 0, 1, 1], [], []>} : vector<16x32xbf16>, vector<32x16xbf16>, vector<16x16xf32> -> vector<16x16xf32>
    %c0_49 = arith.constant 0 : index
    %c1_50 = arith.constant 1 : index
    %c0_51 = arith.constant 0 : index
    %c0_52 = arith.constant 0 : index
    %68 = vector.load %arg6[%c0_49, %c1_50, %c0_51, %c0_52] : memref<1x2x1x16xf32, #tpu.memory_space<vmem>>, vector<1x1x1x16xf32>
    %69 = vector.shape_cast %68 : vector<1x1x1x16xf32> to vector<1x16xf32>
    %70 = vector.broadcast %69 : vector<1x16xf32> to vector<16x16xf32>
    %71 = arith.addf %67, %70 : vector<16x16xf32>
    %72 = vector.shape_cast %71 : vector<16x16xf32> to vector<2x8x16xf32>
    %c0_53 = arith.constant 0 : index
    %c1_54 = arith.constant 1 : index
    %c0_55 = arith.constant 0 : index
    %c0_56 = arith.constant 0 : index
    %73 = vector.load %arg7[%c0_53, %c1_54, %c0_55, %c0_56] : memref<1x2x32x16xbf16, #tpu.memory_space<vmem>>, vector<1x1x32x16xbf16>
    %74 = vector.shape_cast %73 : vector<1x1x32x16xbf16> to vector<32x16xbf16>
    %cst_57 = arith.constant dense<0.000000e+00> : vector<16x16xf32>
    %75 = tpu.matmul %11, %74, %cst_57 {dimension_numbers = #tpu.dot_dimension_numbers<[1], [0], [0], [1], [0, 0, 1, 1], [], []>} : vector<16x32xbf16>, vector<32x16xbf16>, vector<16x16xf32> -> vector<16x16xf32>
    %c0_58 = arith.constant 0 : index
    %c1_59 = arith.constant 1 : index
    %c0_60 = arith.constant 0 : index
    %c0_61 = arith.constant 0 : index
    %76 = vector.load %arg8[%c0_58, %c1_59, %c0_60, %c0_61] : memref<1x2x1x16xf32, #tpu.memory_space<vmem>>, vector<1x1x1x16xf32>
    %77 = vector.shape_cast %76 : vector<1x1x1x16xf32> to vector<1x16xf32>
    %78 = vector.broadcast %77 : vector<1x16xf32> to vector<16x16xf32>
    %79 = arith.addf %75, %78 : vector<16x16xf32>
    %80 = vector.shape_cast %79 : vector<16x16xf32> to vector<2x8x16xf32>
    %c0_62 = arith.constant 0 : index
    %c1_63 = arith.constant 1 : index
    %c0_64 = arith.constant 0 : index
    %c0_65 = arith.constant 0 : index
    %81 = vector.load %arg9[%c0_62, %c1_63, %c0_64, %c0_65] : memref<1x2x32x16xbf16, #tpu.memory_space<vmem>>, vector<1x1x32x16xbf16>
    %82 = vector.shape_cast %81 : vector<1x1x32x16xbf16> to vector<32x16xbf16>
    %cst_66 = arith.constant dense<0.000000e+00> : vector<16x16xf32>
    %83 = tpu.matmul %11, %82, %cst_66 {dimension_numbers = #tpu.dot_dimension_numbers<[1], [0], [0], [1], [0, 0, 1, 1], [], []>} : vector<16x32xbf16>, vector<32x16xbf16>, vector<16x16xf32> -> vector<16x16xf32>
    %c0_67 = arith.constant 0 : index
    %c1_68 = arith.constant 1 : index
    %c0_69 = arith.constant 0 : index
    %c0_70 = arith.constant 0 : index
    %84 = vector.load %arg10[%c0_67, %c1_68, %c0_69, %c0_70] : memref<1x2x1x16xf32, #tpu.memory_space<vmem>>, vector<1x1x1x16xf32>
    %85 = vector.shape_cast %84 : vector<1x1x1x16xf32> to vector<1x16xf32>
    %86 = vector.broadcast %85 : vector<1x16xf32> to vector<16x16xf32>
    %87 = arith.addf %83, %86 : vector<16x16xf32>
    %88 = vector.shape_cast %87 : vector<16x16xf32> to vector<2x8x16xf32>
    %89 = arith.truncf %72 : vector<2x8x16xf32> to vector<2x8x16xbf16>
    %90 = arith.truncf %80 : vector<2x8x16xf32> to vector<2x8x16xbf16>
    "tpu.trace_start"() <{level = 10 : i32, message = "bqd,bkd->bqk"}> : () -> ()
    %cst_71 = arith.constant dense<0.000000e+00> : vector<2x8x8xf32>
    %91 = tpu.matmul %89, %90, %cst_71 {dimension_numbers = #tpu.dot_dimension_numbers<[2], [2], [1], [1], [0, 0, 0, 1, 1, 1], [0], [0]>} : vector<2x8x16xbf16>, vector<2x8x16xbf16>, vector<2x8x8xf32> -> vector<2x8x8xf32>
    "tpu.trace_stop"() : () -> ()
    %92 = vector.broadcast %13 : f32 to vector<2x8x8xf32>
    %93 = arith.mulf %91, %92 : vector<2x8x8xf32>
    %94 = vector.broadcast %8 : vector<2x1x8xf32> to vector<2x8x8xf32>
    %95 = arith.addf %93, %94 : vector<2x8x8xf32>
    %cst_72 = arith.constant dense<0xFF800000> : vector<2x8xf32>
    %96 = vector.multi_reduction <maximumf>, %95, %cst_72 [2] : vector<2x8x8xf32> to vector<2x8xf32>
    %97 = vector.shape_cast %96 : vector<2x8xf32> to vector<2x8x1xf32>
    %98 = vector.broadcast %97 : vector<2x8x1xf32> to vector<2x8x8xf32>
    %99 = arith.subf %95, %98 : vector<2x8x8xf32>
    %100 = math.exp %99 : vector<2x8x8xf32>
    %cst_73 = arith.constant dense<0.000000e+00> : vector<2x8xf32>
    %101 = vector.multi_reduction <add>, %100, %cst_73 [2] : vector<2x8x8xf32> to vector<2x8xf32>
    %102 = vector.shape_cast %101 : vector<2x8xf32> to vector<2x8x1xf32>
    %103 = tpu.reciprocal %102 {approx = true} : vector<2x8x1xf32> -> vector<2x8x1xf32>
    %104 = vector.broadcast %103 : vector<2x8x1xf32> to vector<2x8x8xf32>
    %105 = arith.mulf %100, %104 : vector<2x8x8xf32>
    %106 = arith.truncf %105 : vector<2x8x8xf32> to vector<2x8x8xbf16>
    %107 = arith.truncf %88 : vector<2x8x16xf32> to vector<2x8x16xbf16>
    "tpu.trace_start"() <{level = 10 : i32, message = "bqk,bkd->bqd"}> : () -> ()
    %cst_74 = arith.constant dense<0.000000e+00> : vector<2x8x16xf32>
    %108 = tpu.matmul %106, %107, %cst_74 {dimension_numbers = #tpu.dot_dimension_numbers<[2], [1], [1], [2], [0, 0, 0, 1, 1, 2], [0], [0]>} : vector<2x8x8xbf16>, vector<2x8x16xbf16>, vector<2x8x16xf32> -> vector<2x8x16xf32>
    "tpu.trace_stop"() : () -> ()
    %109 = vector.shape_cast %108 : vector<2x8x16xf32> to vector<16x16xf32>
    %110 = arith.truncf %109 : vector<16x16xf32> to vector<16x16xbf16>
    %c0_75 = arith.constant 0 : index
    %c1_76 = arith.constant 1 : index
    %c0_77 = arith.constant 0 : index
    %c0_78 = arith.constant 0 : index
    %111 = vector.load %arg11[%c0_75, %c1_76, %c0_77, %c0_78] : memref<1x2x16x32xbf16, #tpu.memory_space<vmem>>, vector<1x1x16x32xbf16>
    %112 = vector.shape_cast %111 : vector<1x1x16x32xbf16> to vector<16x32xbf16>
    %cst_79 = arith.constant dense<0.000000e+00> : vector<16x32xf32>
    %113 = tpu.matmul %110, %112, %cst_79 {dimension_numbers = #tpu.dot_dimension_numbers<[1], [0], [0], [1], [0, 0, 1, 1], [], []>} : vector<16x16xbf16>, vector<16x32xbf16>, vector<16x32xf32> -> vector<16x32xf32>
    %114 = arith.addf %64, %113 : vector<16x32xf32>
    %115 = vector.shape_cast %114 : vector<16x32xf32> to vector<2x8x32xf32>
    %c0_80 = arith.constant 0 : index
    %c0_81 = arith.constant 0 : index
    %c0_82 = arith.constant 0 : index
    %116 = vector.load %arg12[%c0_80, %c0_81, %c0_82] : memref<1x1x32xf32, #tpu.memory_space<vmem>>, vector<1x1x32xf32>
    %117 = vector.shape_cast %116 : vector<1x1x32xf32> to vector<1x32xf32>
    %118 = vector.shape_cast %117 : vector<1x32xf32> to vector<1x1x32xf32>
    %119 = vector.broadcast %118 : vector<1x1x32xf32> to vector<2x8x32xf32>
    %120 = arith.addf %115, %119 : vector<2x8x32xf32>
    %121 = arith.addf %9, %120 : vector<2x8x32xf32>
    %c0_83 = arith.constant 0 : index
    %c0_84 = arith.constant 0 : index
    %c0_85 = arith.constant 0 : index
    %122 = vector.load %arg13[%c0_83, %c0_84, %c0_85] : memref<1x1x32xf32, #tpu.memory_space<vmem>>, vector<1x1x32xf32>
    %123 = vector.shape_cast %122 : vector<1x1x32xf32> to vector<1x32xf32>
    %c0_86 = arith.constant 0 : index
    %c0_87 = arith.constant 0 : index
    %c0_88 = arith.constant 0 : index
    %124 = vector.load %arg14[%c0_86, %c0_87, %c0_88] : memref<1x1x32xf32, #tpu.memory_space<vmem>>, vector<1x1x32xf32>
    %125 = vector.shape_cast %124 : vector<1x1x32xf32> to vector<1x32xf32>
    %cst_89 = arith.constant dense<0.000000e+00> : vector<2x8xf32>
    %126 = vector.multi_reduction <add>, %121, %cst_89 [2] : vector<2x8x32xf32> to vector<2x8xf32>
    %127 = vector.shape_cast %126 : vector<2x8xf32> to vector<2x8x1xf32>
    %cst_90 = arith.constant 3.200000e+01 : f32
    %128 = vector.broadcast %cst_90 : f32 to vector<2x8x1xf32>
    %129 = arith.divf %127, %128 : vector<2x8x1xf32>
    %130 = vector.broadcast %129 : vector<2x8x1xf32> to vector<2x8x32xf32>
    %131 = arith.subf %121, %130 : vector<2x8x32xf32>
    %132 = arith.mulf %131, %131 : vector<2x8x32xf32>
    %cst_91 = arith.constant dense<0.000000e+00> : vector<2x8xf32>
    %133 = vector.multi_reduction <add>, %132, %cst_91 [2] : vector<2x8x32xf32> to vector<2x8xf32>
    %134 = vector.shape_cast %133 : vector<2x8xf32> to vector<2x8x1xf32>
    %cst_92 = arith.constant 3.200000e+01 : f32
    %135 = vector.broadcast %cst_92 : f32 to vector<2x8x1xf32>
    %136 = arith.divf %134, %135 : vector<2x8x1xf32>
    %137 = vector.broadcast %129 : vector<2x8x1xf32> to vector<2x8x32xf32>
    %138 = arith.subf %121, %137 : vector<2x8x32xf32>
    %cst_93 = arith.constant 9.99999996E-13 : f32
    %139 = vector.broadcast %cst_93 : f32 to vector<2x8x1xf32>
    %140 = arith.addf %136, %139 : vector<2x8x1xf32>
    %141 = math.rsqrt %140 : vector<2x8x1xf32>
    %142 = vector.broadcast %141 : vector<2x8x1xf32> to vector<2x8x32xf32>
    %143 = arith.mulf %138, %142 : vector<2x8x32xf32>
    %144 = vector.shape_cast %123 : vector<1x32xf32> to vector<1x1x32xf32>
    %145 = vector.broadcast %144 : vector<1x1x32xf32> to vector<2x8x32xf32>
    %146 = arith.mulf %143, %145 : vector<2x8x32xf32>
    %147 = vector.shape_cast %125 : vector<1x32xf32> to vector<1x1x32xf32>
    %148 = vector.broadcast %147 : vector<1x1x32xf32> to vector<2x8x32xf32>
    %149 = arith.addf %146, %148 : vector<2x8x32xf32>
    %150 = vector.shape_cast %149 : vector<2x8x32xf32> to vector<16x32xf32>
    %151 = arith.truncf %150 : vector<16x32xf32> to vector<16x32xbf16>
    %c0_94 = arith.constant 0 : index
    %c0_95 = arith.constant 0 : index
    %c0_96 = arith.constant 0 : index
    %152 = vector.load %arg15[%c0_94, %c0_95, %c0_96] : memref<1x32x64xbf16, #tpu.memory_space<vmem>>, vector<1x32x64xbf16>
    %153 = vector.shape_cast %152 : vector<1x32x64xbf16> to vector<32x64xbf16>
    %cst_97 = arith.constant dense<0.000000e+00> : vector<16x64xf32>
    %154 = tpu.matmul %151, %153, %cst_97 {dimension_numbers = #tpu.dot_dimension_numbers<[1], [0], [0], [1], [0, 0, 1, 1], [], []>} : vector<16x32xbf16>, vector<32x64xbf16>, vector<16x64xf32> -> vector<16x64xf32>
    %c0_98 = arith.constant 0 : index
    %c0_99 = arith.constant 0 : index
    %c0_100 = arith.constant 0 : index
    %155 = vector.load %arg16[%c0_98, %c0_99, %c0_100] : memref<1x1x64xf32, #tpu.memory_space<vmem>>, vector<1x1x64xf32>
    %156 = vector.shape_cast %155 : vector<1x1x64xf32> to vector<1x64xf32>
    %157 = vector.broadcast %156 : vector<1x64xf32> to vector<16x64xf32>
    %158 = arith.addf %154, %157 : vector<16x64xf32>
    %159 = arith.mulf %158, %158 : vector<16x64xf32>
    %160 = arith.mulf %158, %159 : vector<16x64xf32>
    %cst_101 = arith.constant 4.471500e-02 : f32
    %161 = vector.broadcast %cst_101 : f32 to vector<16x64xf32>
    %162 = arith.mulf %161, %160 : vector<16x64xf32>
    %163 = arith.addf %158, %162 : vector<16x64xf32>
    %cst_102 = arith.constant 0.797884583 : f32
    %164 = vector.broadcast %cst_102 : f32 to vector<16x64xf32>
    %165 = arith.mulf %164, %163 : vector<16x64xf32>
    %166 = math.tanh %165 : vector<16x64xf32>
    %cst_103 = arith.constant 1.000000e+00 : f32
    %167 = vector.broadcast %cst_103 : f32 to vector<16x64xf32>
    %168 = arith.addf %167, %166 : vector<16x64xf32>
    %cst_104 = arith.constant 5.000000e-01 : f32
    %169 = vector.broadcast %cst_104 : f32 to vector<16x64xf32>
    %170 = arith.mulf %169, %168 : vector<16x64xf32>
    %171 = arith.mulf %158, %170 : vector<16x64xf32>
    %172 = arith.truncf %171 : vector<16x64xf32> to vector<16x64xbf16>
    %c0_105 = arith.constant 0 : index
    %c0_106 = arith.constant 0 : index
    %c0_107 = arith.constant 0 : index
    %173 = vector.load %arg17[%c0_105, %c0_106, %c0_107] : memref<1x64x32xbf16, #tpu.memory_space<vmem>>, vector<1x64x32xbf16>
    %174 = vector.shape_cast %173 : vector<1x64x32xbf16> to vector<64x32xbf16>
    %cst_108 = arith.constant dense<0.000000e+00> : vector<16x32xf32>
    %175 = tpu.matmul %172, %174, %cst_108 {dimension_numbers = #tpu.dot_dimension_numbers<[1], [0], [0], [1], [0, 0, 1, 1], [], []>} : vector<16x64xbf16>, vector<64x32xbf16>, vector<16x32xf32> -> vector<16x32xf32>
    %c0_109 = arith.constant 0 : index
    %c0_110 = arith.constant 0 : index
    %c0_111 = arith.constant 0 : index
    %176 = vector.load %arg18[%c0_109, %c0_110, %c0_111] : memref<1x1x32xf32, #tpu.memory_space<vmem>>, vector<1x1x32xf32>
    %177 = vector.shape_cast %176 : vector<1x1x32xf32> to vector<1x32xf32>
    %178 = vector.broadcast %177 : vector<1x32xf32> to vector<16x32xf32>
    %179 = arith.addf %175, %178 : vector<16x32xf32>
    %180 = vector.shape_cast %179 : vector<16x32xf32> to vector<2x8x32xf32>
    %181 = arith.addf %149, %180 : vector<2x8x32xf32>
    %c0_112 = arith.constant 0 : index
    %c0_113 = arith.constant 0 : index
    %c0_114 = arith.constant 0 : index
    %182 = vector.load %arg19[%c0_112, %c0_113, %c0_114] : memref<1x1x32xf32, #tpu.memory_space<vmem>>, vector<1x1x32xf32>
    %183 = vector.shape_cast %182 : vector<1x1x32xf32> to vector<1x32xf32>
    %c0_115 = arith.constant 0 : index
    %c0_116 = arith.constant 0 : index
    %c0_117 = arith.constant 0 : index
    %184 = vector.load %arg20[%c0_115, %c0_116, %c0_117] : memref<1x1x32xf32, #tpu.memory_space<vmem>>, vector<1x1x32xf32>
    %185 = vector.shape_cast %184 : vector<1x1x32xf32> to vector<1x32xf32>
    %cst_118 = arith.constant dense<0.000000e+00> : vector<2x8xf32>
    %186 = vector.multi_reduction <add>, %181, %cst_118 [2] : vector<2x8x32xf32> to vector<2x8xf32>
    %187 = vector.shape_cast %186 : vector<2x8xf32> to vector<2x8x1xf32>
    %cst_119 = arith.constant 3.200000e+01 : f32
    %188 = vector.broadcast %cst_119 : f32 to vector<2x8x1xf32>
    %189 = arith.divf %187, %188 : vector<2x8x1xf32>
    %190 = vector.broadcast %189 : vector<2x8x1xf32> to vector<2x8x32xf32>
    %191 = arith.subf %181, %190 : vector<2x8x32xf32>
    %192 = arith.mulf %191, %191 : vector<2x8x32xf32>
    %cst_120 = arith.constant dense<0.000000e+00> : vector<2x8xf32>
    %193 = vector.multi_reduction <add>, %192, %cst_120 [2] : vector<2x8x32xf32> to vector<2x8xf32>
    %194 = vector.shape_cast %193 : vector<2x8xf32> to vector<2x8x1xf32>
    %cst_121 = arith.constant 3.200000e+01 : f32
    %195 = vector.broadcast %cst_121 : f32 to vector<2x8x1xf32>
    %196 = arith.divf %194, %195 : vector<2x8x1xf32>
    %197 = vector.broadcast %189 : vector<2x8x1xf32> to vector<2x8x32xf32>
    %198 = arith.subf %181, %197 : vector<2x8x32xf32>
    %cst_122 = arith.constant 9.99999996E-13 : f32
    %199 = vector.broadcast %cst_122 : f32 to vector<2x8x1xf32>
    %200 = arith.addf %196, %199 : vector<2x8x1xf32>
    %201 = math.rsqrt %200 : vector<2x8x1xf32>
    %202 = vector.broadcast %201 : vector<2x8x1xf32> to vector<2x8x32xf32>
    %203 = arith.mulf %198, %202 : vector<2x8x32xf32>
    %204 = vector.shape_cast %183 : vector<1x32xf32> to vector<1x1x32xf32>
    %205 = vector.broadcast %204 : vector<1x1x32xf32> to vector<2x8x32xf32>
    %206 = arith.mulf %203, %205 : vector<2x8x32xf32>
    %207 = vector.shape_cast %185 : vector<1x32xf32> to vector<1x1x32xf32>
    %208 = vector.broadcast %207 : vector<1x1x32xf32> to vector<2x8x32xf32>
    %209 = arith.addf %206, %208 : vector<2x8x32xf32>
    %c0_123 = arith.constant 0 : index
    %c0_124 = arith.constant 0 : index
    %c0_125 = arith.constant 0 : index
    %210 = vector.load %arg22[%c0_123, %c0_124, %c0_125] : memref<2x8x32xf32, #tpu.memory_space<vmem>>, vector<2x8x32xf32>
    tpu.vector_store %arg22[%c0_123, %c0_124, %c0_125], %209 {strides = array<i32>} : memref<2x8x32xf32, #tpu.memory_space<vmem>>, vector<2x8x32xf32>,
    %c1_i32 = arith.constant 1 : i32
    %211 = arith.cmpi eq, %arg0, %c1_i32 : i32
    %212 = arith.extui %211 : i1 to i32
    %c0_i32_126 = arith.constant 0 : i32
    %213 = arith.cmpi ne, %212, %c0_i32_126 : i32
    scf.if %213 {
      %214 = vector.shape_cast %3 : vector<2x8xf32> to vector<2x8x1xf32>
      %215 = vector.broadcast %214 : vector<2x8x1xf32> to vector<2x8x32xf32>
      %216 = arith.mulf %209, %215 : vector<2x8x32xf32>
      %cst_127 = arith.constant dense<0.000000e+00> : vector<2x32xf32>
      %217 = vector.multi_reduction <add>, %216, %cst_127 [1] : vector<2x8x32xf32> to vector<2x32xf32>
      %cst_128 = arith.constant dense<0.000000e+00> : vector<2xf32>
      %218 = vector.multi_reduction <add>, %3, %cst_128 [1] : vector<2x8xf32> to vector<2xf32>
      %219 = vector.shape_cast %218 : vector<2xf32> to vector<2x1xf32>
      %cst_129 = arith.constant 9.99999971E-10 : f32
      %220 = vector.broadcast %cst_129 : f32 to vector<2x1xf32>
      %221 = arith.maximumf %219, %220 : vector<2x1xf32>
      %222 = tpu.reciprocal %221 {approx = true} : vector<2x1xf32> -> vector<2x1xf32>
      %223 = vector.broadcast %222 : vector<2x1xf32> to vector<2x32xf32>
      %224 = arith.mulf %217, %223 : vector<2x32xf32>
      %c0_130 = arith.constant 0 : index
      %c0_131 = arith.constant 0 : index
      %225 = vector.load %arg21[%c0_130, %c0_131] : memref<2x32xf32, #tpu.memory_space<vmem>>, vector<2x32xf32>
      tpu.vector_store %arg21[%c0_130, %c0_131], %224 {strides = array<i32>} : memref<2x32xf32, #tpu.memory_space<vmem>>, vector<2x32xf32>,
    } else {
    }
    return
  }
  func.func @transform_0(%arg0: i32) -> (i32, i32) {
    %c0_i32 = arith.constant 0 : i32
    %c0_i32_0 = arith.constant 0 : i32
    %c0_i32_1 = arith.constant 0 : i32
    return %c0_i32, %c0_i32_0 : i32, i32
  }
  func.func @transform_1(%arg0: i32) -> (i32, i32, i32) {
    %c0_i32 = arith.constant 0 : i32
    %c0_i32_0 = arith.constant 0 : i32
    %c0_i32_1 = arith.constant 0 : i32
    %c0_i32_2 = arith.constant 0 : i32
    return %c0_i32, %c0_i32_0, %c0_i32_1 : i32, i32, i32
  }
  func.func @transform_2(%arg0: i32) -> (i32, i32) {
    %c0_i32 = arith.constant 0 : i32
    %c0_i32_0 = arith.constant 0 : i32
    %c0_i32_1 = arith.constant 0 : i32
    return %c0_i32, %c0_i32_0 : i32, i32
  }
  func.func @transform_3(%arg0: i32) -> (i32, i32) {
    %c0_i32 = arith.constant 0 : i32
    %c0_i32_0 = arith.constant 0 : i32
    %c0_i32_1 = arith.constant 0 : i32
    return %c0_i32, %c0_i32_0 : i32, i32
  }
  func.func @transform_4(%arg0: i32) -> (i32, i32, i32, i32) {
    %c0_i32 = arith.constant 0 : i32
    %c0_i32_0 = arith.constant 0 : i32
    %c0_i32_1 = arith.constant 0 : i32
    %c0_i32_2 = arith.constant 0 : i32
    return %arg0, %c0_i32, %c0_i32_0, %c0_i32_1 : i32, i32, i32, i32
  }
  func.func @transform_5(%arg0: i32) -> (i32, i32, i32, i32) {
    %c0_i32 = arith.constant 0 : i32
    %c0_i32_0 = arith.constant 0 : i32
    %c0_i32_1 = arith.constant 0 : i32
    %c0_i32_2 = arith.constant 0 : i32
    return %arg0, %c0_i32, %c0_i32_0, %c0_i32_1 : i32, i32, i32, i32
  }
  func.func @transform_6(%arg0: i32) -> (i32, i32, i32, i32) {
    %c0_i32 = arith.constant 0 : i32
    %c0_i32_0 = arith.constant 0 : i32
    %c0_i32_1 = arith.constant 0 : i32
    %c0_i32_2 = arith.constant 0 : i32
    return %arg0, %c0_i32, %c0_i32_0, %c0_i32_1 : i32, i32, i32, i32
  }
  func.func @transform_7(%arg0: i32) -> (i32, i32, i32, i32) {
    %c0_i32 = arith.constant 0 : i32
    %c0_i32_0 = arith.constant 0 : i32
    %c0_i32_1 = arith.constant 0 : i32
    %c0_i32_2 = arith.constant 0 : i32
    return %arg0, %c0_i32, %c0_i32_0, %c0_i32_1 : i32, i32, i32, i32
  }
  func.func @transform_8(%arg0: i32) -> (i32, i32, i32, i32) {
    %c0_i32 = arith.constant 0 : i32
    %c0_i32_0 = arith.constant 0 : i32
    %c0_i32_1 = arith.constant 0 : i32
    %c0_i32_2 = arith.constant 0 : i32
    return %arg0, %c0_i32, %c0_i32_0, %c0_i32_1 : i32, i32, i32, i32
  }
  func.func @transform_9(%arg0: i32) -> (i32, i32, i32, i32) {
    %c0_i32 = arith.constant 0 : i32
    %c0_i32_0 = arith.constant 0 : i32
    %c0_i32_1 = arith.constant 0 : i32
    %c0_i32_2 = arith.constant 0 : i32
    return %arg0, %c0_i32, %c0_i32_0, %c0_i32_1 : i32, i32, i32, i32
  }
  func.func @transform_10(%arg0: i32) -> (i32, i32, i32, i32) {
    %c0_i32 = arith.constant 0 : i32
    %c0_i32_0 = arith.constant 0 : i32
    %c0_i32_1 = arith.constant 0 : i32
    %c0_i32_2 = arith.constant 0 : i32
    return %arg0, %c0_i32, %c0_i32_0, %c0_i32_1 : i32, i32, i32, i32
  }
  func.func @transform_11(%arg0: i32) -> (i32, i32, i32) {
    %c0_i32 = arith.constant 0 : i32
    %c0_i32_0 = arith.constant 0 : i32
    %c0_i32_1 = arith.constant 0 : i32
    return %arg0, %c0_i32, %c0_i32_0 : i32, i32, i32
  }
  func.func @transform_12(%arg0: i32) -> (i32, i32, i32) {
    %c0_i32 = arith.constant 0 : i32
    %c0_i32_0 = arith.constant 0 : i32
    %c0_i32_1 = arith.constant 0 : i32
    return %arg0, %c0_i32, %c0_i32_0 : i32, i32, i32
  }
  func.func @transform_13(%arg0: i32) -> (i32, i32, i32) {
    %c0_i32 = arith.constant 0 : i32
    %c0_i32_0 = arith.constant 0 : i32
    %c0_i32_1 = arith.constant 0 : i32
    return %arg0, %c0_i32, %c0_i32_0 : i32, i32, i32
  }
  func.func @transform_14(%arg0: i32) -> (i32, i32, i32) {
    %c0_i32 = arith.constant 0 : i32
    %c0_i32_0 = arith.constant 0 : i32
    %c0_i32_1 = arith.constant 0 : i32
    return %arg0, %c0_i32, %c0_i32_0 : i32, i32, i32
  }
  func.func @transform_15(%arg0: i32) -> (i32, i32, i32) {
    %c0_i32 = arith.constant 0 : i32
    %c0_i32_0 = arith.constant 0 : i32
    %c0_i32_1 = arith.constant 0 : i32
    return %arg0, %c0_i32, %c0_i32_0 : i32, i32, i32
  }
  func.func @transform_16(%arg0: i32) -> (i32, i32, i32) {
    %c0_i32 = arith.constant 0 : i32
    %c0_i32_0 = arith.constant 0 : i32
    %c0_i32_1 = arith.constant 0 : i32
    return %arg0, %c0_i32, %c0_i32_0 : i32, i32, i32
  }
  func.func @transform_17(%arg0: i32) -> (i32, i32, i32) {
    %c0_i32 = arith.constant 0 : i32
    %c0_i32_0 = arith.constant 0 : i32
    %c0_i32_1 = arith.constant 0 : i32
    return %arg0, %c0_i32, %c0_i32_0 : i32, i32, i32
  }
  func.func @transform_18(%arg0: i32) -> (i32, i32, i32) {
    %c0_i32 = arith.constant 0 : i32
    %c0_i32_0 = arith.constant 0 : i32
    %c0_i32_1 = arith.constant 0 : i32
    return %arg0, %c0_i32, %c0_i32_0 : i32, i32, i32
  }
  func.func @transform_19(%arg0: i32) -> (i32, i32, i32) {
    %c0_i32 = arith.constant 0 : i32
    %c0_i32_0 = arith.constant 0 : i32
    %c0_i32_1 = arith.constant 0 : i32
    return %arg0, %c0_i32, %c0_i32_0 : i32, i32, i32
  }
  func.func @transform_20(%arg0: i32) -> (i32, i32) {
    %c0_i32 = arith.constant 0 : i32
    %c0_i32_0 = arith.constant 0 : i32
    %c0_i32_1 = arith.constant 0 : i32
    return %c0_i32, %c0_i32_0 : i32, i32
  }
}

</mosaic_0001>

<llo_original>
// kernel: tpu_custom_call.1
$region0: #{tpu_custom_call.1}
  #allocation0 [shape = 'u32[]', space=smem, size = 0x4, offset = 0x4, fixed_abs, tag = 'smem constant byte address 0x4 - core index']
  #allocation1 [shape = 'u32[144,128]{1,0:T(1,128)}', space=vmem, size = 0x12000, scoped, tag = 'internal scratch']
  #allocation2 [shape = 'f32[2,8,32]{2,1,0:T(8,128)}', space=vmem, size = 0x2000, scoped, tag = 'scratch operand']
  %s0 = inlined_call_operand.vmem [shape: f32[2,8], index: 0, kind: input, shape index: {}]
  %s1 = inlined_call_operand.vmem [shape: f32[2,8,32], index: 1, kind: input, shape index: {}]
  %s2 = inlined_call_operand.vmem [shape: f32[1,32], index: 2, kind: input, shape index: {}]
  %s3 = inlined_call_operand.vmem [shape: f32[1,32], index: 3, kind: input, shape index: {}]
  %s4 = inlined_call_operand.vmem [shape: bf16[2,2,32,16], index: 4, kind: input, shape index: {}]
  %s5 = inlined_call_operand.vmem [shape: f32[2,2,1,16], index: 5, kind: input, shape index: {}]
  %s6 = inlined_call_operand.vmem [shape: bf16[2,2,32,16], index: 6, kind: input, shape index: {}]
  %s7 = inlined_call_operand.vmem [shape: f32[2,2,1,16], index: 7, kind: input, shape index: {}]
  %s8 = inlined_call_operand.vmem [shape: bf16[2,2,32,16], index: 8, kind: input, shape index: {}]
  %s9 = inlined_call_operand.vmem [shape: f32[2,2,1,16], index: 9, kind: input, shape index: {}]
  %s10 = inlined_call_operand.vmem [shape: bf16[2,2,16,32], index: 10, kind: input, shape index: {}]
  %s11 = inlined_call_operand.vmem [shape: f32[2,1,32], index: 11, kind: input, shape index: {}]
  %s12 = inlined_call_operand.vmem [shape: f32[2,1,32], index: 12, kind: input, shape index: {}]
  %s13 = inlined_call_operand.vmem [shape: f32[2,1,32], index: 13, kind: input, shape index: {}]
  %s14 = inlined_call_operand.vmem [shape: bf16[2,32,64], index: 14, kind: input, shape index: {}]
  %s15 = inlined_call_operand.vmem [shape: f32[2,1,64], index: 15, kind: input, shape index: {}]
  %s16 = inlined_call_operand.vmem [shape: bf16[2,64,32], index: 16, kind: input, shape index: {}]
  %s17 = inlined_call_operand.vmem [shape: f32[2,1,32], index: 17, kind: input, shape index: {}]
  %s18 = inlined_call_operand.vmem [shape: f32[2,1,32], index: 18, kind: input, shape index: {}]
  %s19 = inlined_call_operand.vmem [shape: f32[2,1,32], index: 19, kind: input, shape index: {}]
  %s20 = inlined_call_operand.hbm [shape: f32[2,32], index: 20, kind: output, shape index: {}]
  %s21 = sld [smem:[#allocation0]]
  $region121: #{tpu_custom_call.1} parent=0
    _
  %s23 = ssub.s32 1, %s21
  %s24 = scalar_select 0, %s23, %s21
  $region1: #{tpu_custom_call.1} parent=0
    #allocation3 [shape = 'u8[1024]{0}', space=vmem, size = 0x400, scoped, tag = 'output window, operand 0, single buffered']
    #allocation4 [shape = 's32[2]{0}', space=sflag, size = 0x8, scoped, tag = 'scoped memory for tpu_custom_call.1']
    %25 = vsyncpa [#allocation4], 0
    loop: start=0, step=1, limit=4
    $region2: #{tpu_custom_call.1} parent=1 // loop_pre_header
      _
    $region3: #{tpu_custom_call.1} parent=1 // loop_header
      %s27 = sphi 0, %s31
      %p28 = scmp.ge.s32.totalorder %s27, 4
      %s35 = sphi 0, %s35
      %s37 = sphi 0, %s35
      %s38 = sphi 0, %s37
      %s52 = sphi 0, %s38
      %s56 = sphi 0, %s56
      %s58 = sphi 0, %s56
      %s59 = sphi 0, %s58
      %s73 = sphi 0, %s59
      %s77 = sphi 0, %s77
      %s79 = sphi 0, %s77
      %s80 = sphi 0, %s79
      %s94 = sphi 0, %s80
      %s98 = sphi 0, %s98
      %s100 = sphi 0, %s98
      %s101 = sphi 0, %s100
      %s115 = sphi 0, %s101
      %s121 = sphi 0, %s123
      %s124 = sphi 0, %s121
      %s125 = sphi 0, %s124
      %s141 = sphi 0, %s125
      %s147 = sphi 0, %s149
      %s150 = sphi 0, %s147
      %s151 = sphi 0, %s150
      %s167 = sphi 0, %s151
      %s173 = sphi 0, %s175
      %s176 = sphi 0, %s173
      %s177 = sphi 0, %s176
      %s193 = sphi 0, %s177
      %s199 = sphi 0, %s201
      %s202 = sphi 0, %s199
      %s203 = sphi 0, %s202
      %s219 = sphi 0, %s203
      %s225 = sphi 0, %s227
      %s228 = sphi 0, %s225
      %s229 = sphi 0, %s228
      %s245 = sphi 0, %s229
      %s251 = sphi 0, %s253
      %s254 = sphi 0, %s251
      %s255 = sphi 0, %s254
      %s271 = sphi 0, %s255
      %s277 = sphi 0, %s279
      %s280 = sphi 0, %s277
      %s281 = sphi 0, %s280
      %s297 = sphi 0, %s281
      %s303 = sphi 0, %s305
      %s306 = sphi 0, %s303
      %s307 = sphi 0, %s306
      %s323 = sphi 0, %s307
      %s329 = sphi 0, %s331
      %s332 = sphi 0, %s329
      %s333 = sphi 0, %s332
      %s349 = sphi 0, %s333
      %s355 = sphi 0, %s357
      %s358 = sphi 0, %s355
      %s359 = sphi 0, %s358
      %s375 = sphi 0, %s359
      %s381 = sphi 0, %s383
      %s384 = sphi 0, %s381
      %s385 = sphi 0, %s384
      %s401 = sphi 0, %s385
      %s407 = sphi 0, %s409
      %s410 = sphi 0, %s407
      %s411 = sphi 0, %s410
      %s427 = sphi 0, %s411
      %s433 = sphi 0, %s435
      %s436 = sphi 0, %s433
      %s437 = sphi 0, %s436
      %s453 = sphi 0, %s437
      %s459 = sphi 0, %s461
      %s462 = sphi 0, %s459
      %s463 = sphi 0, %s462
      %s479 = sphi 0, %s463
      %s485 = sphi 0, %s487
      %s488 = sphi 0, %s485
      %s489 = sphi 0, %s488
      %s505 = sphi 0, %s489
      %s511 = sphi 0, %s513
      %s514 = sphi 0, %s511
      %s515 = sphi 0, %s514
      %s531 = sphi 0, %s515
      %s535 = sphi 0, %s535
      %s537 = sphi 0, %s535
      %s538 = sphi 0, %s537
      %s552 = sphi 0, %s538
    $region4: #{tpu_custom_call.1} parent=1 // loop_header_branch
      %30 = sbr.rel (%p28) target = $region8
    $region5: #{tpu_custom_call.1} parent=1 // loop_body
      %s32 = ssub.s32 %s27, 1
      %s33 = ssub.s32 %s27, 2
      %s34 = sadd.s32 %s27, 1
      %s36 = sadd.s32 %s35, 1
      %p39 = scmp.eq.s32.totalorder %s27, 1
      %p40 = scmp.ne.s32.totalorder %s35, %s37
      %p41 = scmp.eq.s32.totalorder %s27, 0
      %p42 = por %p40, %p41
      %p43 = scmp.ne.s32.totalorder %s35, %s37
      %p44 = scmp.eq.s32.totalorder %s32, 1
      %p45 = por %p43, %p44
      %p46 = scmp.ne.s32.totalorder %s37, %s38
      %p47 = scmp.eq.s32.totalorder %s32, 0
      %p48 = por %p46, %p47
      %p49 = scmp.ne.s32.totalorder %s37, %s38
      %p50 = scmp.eq.s32.totalorder %s33, 1
      %p51 = por %p49, %p50
      %p53 = scmp.ne.s32.totalorder %s38, %s52
      %p54 = scmp.eq.s32.totalorder %s33, 0
      %p55 = por %p53, %p54
      %s57 = sadd.s32 %s56, 1
      %p60 = scmp.eq.s32.totalorder %s27, 1
      %p61 = scmp.ne.s32.totalorder %s56, %s58
      %p62 = scmp.eq.s32.totalorder %s27, 0
      %p63 = por %p61, %p62
      %p64 = scmp.ne.s32.totalorder %s56, %s58
      %p65 = scmp.eq.s32.totalorder %s32, 1
      %p66 = por %p64, %p65
      %p67 = scmp.ne.s32.totalorder %s58, %s59
      %p68 = scmp.eq.s32.totalorder %s32, 0
      %p69 = por %p67, %p68
      %p70 = scmp.ne.s32.totalorder %s58, %s59
      %p71 = scmp.eq.s32.totalorder %s33, 1
      %p72 = por %p70, %p71
      %p74 = scmp.ne.s32.totalorder %s59, %s73
      %p75 = scmp.eq.s32.totalorder %s33, 0
      %p76 = por %p74, %p75
      %s78 = sadd.s32 %s77, 1
      %p81 = scmp.eq.s32.totalorder %s27, 1
      %p82 = scmp.ne.s32.totalorder %s77, %s79
      %p83 = scmp.eq.s32.totalorder %s27, 0
      %p84 = por %p82, %p83
      %p85 = scmp.ne.s32.totalorder %s77, %s79
      %p86 = scmp.eq.s32.totalorder %s32, 1
      %p87 = por %p85, %p86
      %p88 = scmp.ne.s32.totalorder %s79, %s80
      %p89 = scmp.eq.s32.totalorder %s32, 0
      %p90 = por %p88, %p89
      %p91 = scmp.ne.s32.totalorder %s79, %s80
      %p92 = scmp.eq.s32.totalorder %s33, 1
      %p93 = por %p91, %p92
      %p95 = scmp.ne.s32.totalorder %s80, %s94
      %p96 = scmp.eq.s32.totalorder %s33, 0
      %p97 = por %p95, %p96
      %s99 = sadd.s32 %s98, 1
      %p102 = scmp.eq.s32.totalorder %s27, 1
      %p103 = scmp.ne.s32.totalorder %s98, %s100
      %p104 = scmp.eq.s32.totalorder %s27, 0
      %p105 = por %p103, %p104
      %p106 = scmp.ne.s32.totalorder %s98, %s100
      %p107 = scmp.eq.s32.totalorder %s32, 1
      %p108 = por %p106, %p107
      %p109 = scmp.ne.s32.totalorder %s100, %s101
      %p110 = scmp.eq.s32.totalorder %s32, 0
      %p111 = por %p109, %p110
      %p112 = scmp.ne.s32.totalorder %s100, %s101
      %p113 = scmp.eq.s32.totalorder %s33, 1
      %p114 = por %p112, %p113
      %p116 = scmp.ne.s32.totalorder %s101, %s115
      %p117 = scmp.eq.s32.totalorder %s33, 0
      %p118 = por %p116, %p117
      %s119 = ssub.s32 %s27, %s34
      %p120 = scmp.eq.s32.totalorder %s119, 0
      %s122 = sadd.s32 %s121, 1
      %s123 = scalar_select %p120, %s121, %s122
      %p126 = pneg %p120
      %p127 = scmp.eq.s32.totalorder %s27, 1
      %p128 = por %p126, %p127
      %p129 = scmp.ne.s32.totalorder %s121, %s124
      %p130 = scmp.eq.s32.totalorder %s27, 0
      %p131 = por %p129, %p130
      %p132 = scmp.ne.s32.totalorder %s121, %s124
      %p133 = scmp.eq.s32.totalorder %s32, 1
      %p134 = por %p132, %p133
      %p135 = scmp.ne.s32.totalorder %s124, %s125
      %p136 = scmp.eq.s32.totalorder %s32, 0
      %p137 = por %p135, %p136
      %p138 = scmp.ne.s32.totalorder %s124, %s125
      %p139 = scmp.eq.s32.totalorder %s33, 1
      %p140 = por %p138, %p139
      %p142 = scmp.ne.s32.totalorder %s125, %s141
      %p143 = scmp.eq.s32.totalorder %s33, 0
      %p144 = por %p142, %p143
      %s145 = ssub.s32 %s27, %s34
      %p146 = scmp.eq.s32.totalorder %s145, 0
      %s148 = sadd.s32 %s147, 1
      %s149 = scalar_select %p146, %s147, %s148
      %p152 = pneg %p146
      %p153 = scmp.eq.s32.totalorder %s27, 1
      %p154 = por %p152, %p153
      %p155 = scmp.ne.s32.totalorder %s147, %s150
      %p156 = scmp.eq.s32.totalorder %s27, 0
      %p157 = por %p155, %p156
      %p158 = scmp.ne.s32.totalorder %s147, %s150
      %p159 = scmp.eq.s32.totalorder %s32, 1
      %p160 = por %p158, %p159
      %p161 = scmp.ne.s32.totalorder %s150, %s151
      %p162 = scmp.eq.s32.totalorder %s32, 0
      %p163 = por %p161, %p162
      %p164 = scmp.ne.s32.totalorder %s150, %s151
      %p165 = scmp.eq.s32.totalorder %s33, 1
      %p166 = por %p164, %p165
      %p168 = scmp.ne.s32.totalorder %s151, %s167
      %p169 = scmp.eq.s32.totalorder %s33, 0
      %p170 = por %p168, %p169
      %s171 = ssub.s32 %s27, %s34
      %p172 = scmp.eq.s32.totalorder %s171, 0
      %s174 = sadd.s32 %s173, 1
      %s175 = scalar_select %p172, %s173, %s174
      %p178 = pneg %p172
      %p179 = scmp.eq.s32.totalorder %s27, 1
      %p180 = por %p178, %p179
      %p181 = scmp.ne.s32.totalorder %s173, %s176
      %p182 = scmp.eq.s32.totalorder %s27, 0
      %p183 = por %p181, %p182
      %p184 = scmp.ne.s32.totalorder %s173, %s176
      %p185 = scmp.eq.s32.totalorder %s32, 1
      %p186 = por %p184, %p185
      %p187 = scmp.ne.s32.totalorder %s176, %s177
      %p188 = scmp.eq.s32.totalorder %s32, 0
      %p189 = por %p187, %p188
      %p190 = scmp.ne.s32.totalorder %s176, %s177
      %p191 = scmp.eq.s32.totalorder %s33, 1
      %p192 = por %p190, %p191
      %p194 = scmp.ne.s32.totalorder %s177, %s193
      %p195 = scmp.eq.s32.totalorder %s33, 0
      %p196 = por %p194, %p195
      %s197 = ssub.s32 %s27, %s34
      %p198 = scmp.eq.s32.totalorder %s197, 0
      %s200 = sadd.s32 %s199, 1
      %s201 = scalar_select %p198, %s199, %s200
      %p204 = pneg %p198
      %p205 = scmp.eq.s32.totalorder %s27, 1
      %p206 = por %p204, %p205
      %p207 = scmp.ne.s32.totalorder %s199, %s202
      %p208 = scmp.eq.s32.totalorder %s27, 0
      %p209 = por %p207, %p208
      %p210 = scmp.ne.s32.totalorder %s199, %s202
      %p211 = scmp.eq.s32.totalorder %s32, 1
      %p212 = por %p210, %p211
      %p213 = scmp.ne.s32.totalorder %s202, %s203
      %p214 = scmp.eq.s32.totalorder %s32, 0
      %p215 = por %p213, %p214
      %p216 = scmp.ne.s32.totalorder %s202, %s203
      %p217 = scmp.eq.s32.totalorder %s33, 1
      %p218 = por %p216, %p217
      %p220 = scmp.ne.s32.totalorder %s203, %s219
      %p221 = scmp.eq.s32.totalorder %s33, 0
      %p222 = por %p220, %p221
      %s223 = ssub.s32 %s27, %s34
      %p224 = scmp.eq.s32.totalorder %s223, 0
      %s226 = sadd.s32 %s225, 1
      %s227 = scalar_select %p224, %s225, %s226
      %p230 = pneg %p224
      %p231 = scmp.eq.s32.totalorder %s27, 1
      %p232 = por %p230, %p231
      %p233 = scmp.ne.s32.totalorder %s225, %s228
      %p234 = scmp.eq.s32.totalorder %s27, 0
      %p235 = por %p233, %p234
      %p236 = scmp.ne.s32.totalorder %s225, %s228
      %p237 = scmp.eq.s32.totalorder %s32, 1
      %p238 = por %p236, %p237
      %p239 = scmp.ne.s32.totalorder %s228, %s229
      %p240 = scmp.eq.s32.totalorder %s32, 0
      %p241 = por %p239, %p240
      %p242 = scmp.ne.s32.totalorder %s228, %s229
      %p243 = scmp.eq.s32.totalorder %s33, 1
      %p244 = por %p242, %p243
      %p246 = scmp.ne.s32.totalorder %s229, %s245
      %p247 = scmp.eq.s32.totalorder %s33, 0
      %p248 = por %p246, %p247
      %s249 = ssub.s32 %s27, %s34
      %p250 = scmp.eq.s32.totalorder %s249, 0
      %s252 = sadd.s32 %s251, 1
      %s253 = scalar_select %p250, %s251, %s252
      %p256 = pneg %p250
      %p257 = scmp.eq.s32.totalorder %s27, 1
      %p258 = por %p256, %p257
      %p259 = scmp.ne.s32.totalorder %s251, %s254
      %p260 = scmp.eq.s32.totalorder %s27, 0
      %p261 = por %p259, %p260
      %p262 = scmp.ne.s32.totalorder %s251, %s254
      %p263 = scmp.eq.s32.totalorder %s32, 1
      %p264 = por %p262, %p263
      %p265 = scmp.ne.s32.totalorder %s254, %s255
      %p266 = scmp.eq.s32.totalorder %s32, 0
      %p267 = por %p265, %p266
      %p268 = scmp.ne.s32.totalorder %s254, %s255
      %p269 = scmp.eq.s32.totalorder %s33, 1
      %p270 = por %p268, %p269
      %p272 = scmp.ne.s32.totalorder %s255, %s271
      %p273 = scmp.eq.s32.totalorder %s33, 0
      %p274 = por %p272, %p273
      %s275 = ssub.s32 %s27, %s34
      %p276 = scmp.eq.s32.totalorder %s275, 0
      %s278 = sadd.s32 %s277, 1
      %s279 = scalar_select %p276, %s277, %s278
      %p282 = pneg %p276
      %p283 = scmp.eq.s32.totalorder %s27, 1
      %p284 = por %p282, %p283
      %p285 = scmp.ne.s32.totalorder %s277, %s280
      %p286 = scmp.eq.s32.totalorder %s27, 0
      %p287 = por %p285, %p286
      %p288 = scmp.ne.s32.totalorder %s277, %s280
      %p289 = scmp.eq.s32.totalorder %s32, 1
      %p290 = por %p288, %p289
      %p291 = scmp.ne.s32.totalorder %s280, %s281
      %p292 = scmp.eq.s32.totalorder %s32, 0
      %p293 = por %p291, %p292
      %p294 = scmp.ne.s32.totalorder %s280, %s281
      %p295 = scmp.eq.s32.totalorder %s33, 1
      %p296 = por %p294, %p295
      %p298 = scmp.ne.s32.totalorder %s281, %s297
      %p299 = scmp.eq.s32.totalorder %s33, 0
      %p300 = por %p298, %p299
      %s301 = ssub.s32 %s27, %s34
      %p302 = scmp.eq.s32.totalorder %s301, 0
      %s304 = sadd.s32 %s303, 1
      %s305 = scalar_select %p302, %s303, %s304
      %p308 = pneg %p302
      %p309 = scmp.eq.s32.totalorder %s27, 1
      %p310 = por %p308, %p309
      %p311 = scmp.ne.s32.totalorder %s303, %s306
      %p312 = scmp.eq.s32.totalorder %s27, 0
      %p313 = por %p311, %p312
      %p314 = scmp.ne.s32.totalorder %s303, %s306
      %p315 = scmp.eq.s32.totalorder %s32, 1
      %p316 = por %p314, %p315
      %p317 = scmp.ne.s32.totalorder %s306, %s307
      %p318 = scmp.eq.s32.totalorder %s32, 0
      %p319 = por %p317, %p318
      %p320 = scmp.ne.s32.totalorder %s306, %s307
      %p321 = scmp.eq.s32.totalorder %s33, 1
      %p322 = por %p320, %p321
      %p324 = scmp.ne.s32.totalorder %s307, %s323
      %p325 = scmp.eq.s32.totalorder %s33, 0
      %p326 = por %p324, %p325
      %s327 = ssub.s32 %s27, %s34
      %p328 = scmp.eq.s32.totalorder %s327, 0
      %s330 = sadd.s32 %s329, 1
      %s331 = scalar_select %p328, %s329, %s330
      %p334 = pneg %p328
      %p335 = scmp.eq.s32.totalorder %s27, 1
      %p336 = por %p334, %p335
      %p337 = scmp.ne.s32.totalorder %s329, %s332
      %p338 = scmp.eq.s32.totalorder %s27, 0
      %p339 = por %p337, %p338
      %p340 = scmp.ne.s32.totalorder %s329, %s332
      %p341 = scmp.eq.s32.totalorder %s32, 1
      %p342 = por %p340, %p341
      %p343 = scmp.ne.s32.totalorder %s332, %s333
      %p344 = scmp.eq.s32.totalorder %s32, 0
      %p345 = por %p343, %p344
      %p346 = scmp.ne.s32.totalorder %s332, %s333
      %p347 = scmp.eq.s32.totalorder %s33, 1
      %p348 = por %p346, %p347
      %p350 = scmp.ne.s32.totalorder %s333, %s349
      %p351 = scmp.eq.s32.totalorder %s33, 0
      %p352 = por %p350, %p351
      %s353 = ssub.s32 %s27, %s34
      %p354 = scmp.eq.s32.totalorder %s353, 0
      %s356 = sadd.s32 %s355, 1
      %s357 = scalar_select %p354, %s355, %s356
      %p360 = pneg %p354
      %p361 = scmp.eq.s32.totalorder %s27, 1
      %p362 = por %p360, %p361
      %p363 = scmp.ne.s32.totalorder %s355, %s358
      %p364 = scmp.eq.s32.totalorder %s27, 0
      %p365 = por %p363, %p364
      %p366 = scmp.ne.s32.totalorder %s355, %s358
      %p367 = scmp.eq.s32.totalorder %s32, 1
      %p368 = por %p366, %p367
      %p369 = scmp.ne.s32.totalorder %s358, %s359
      %p370 = scmp.eq.s32.totalorder %s32, 0
      %p371 = por %p369, %p370
      %p372 = scmp.ne.s32.totalorder %s358, %s359
      %p373 = scmp.eq.s32.totalorder %s33, 1
      %p374 = por %p372, %p373
      %p376 = scmp.ne.s32.totalorder %s359, %s375
      %p377 = scmp.eq.s32.totalorder %s33, 0
      %p378 = por %p376, %p377
      %s379 = ssub.s32 %s27, %s34
      %p380 = scmp.eq.s32.totalorder %s379, 0
      %s382 = sadd.s32 %s381, 1
      %s383 = scalar_select %p380, %s381, %s382
      %p386 = pneg %p380
      %p387 = scmp.eq.s32.totalorder %s27, 1
      %p388 = por %p386, %p387
      %p389 = scmp.ne.s32.totalorder %s381, %s384
      %p390 = scmp.eq.s32.totalorder %s27, 0
      %p391 = por %p389, %p390
      %p392 = scmp.ne.s32.totalorder %s381, %s384
      %p393 = scmp.eq.s32.totalorder %s32, 1
      %p394 = por %p392, %p393
      %p395 = scmp.ne.s32.totalorder %s384, %s385
      %p396 = scmp.eq.s32.totalorder %s32, 0
      %p397 = por %p395, %p396
      %p398 = scmp.ne.s32.totalorder %s384, %s385
      %p399 = scmp.eq.s32.totalorder %s33, 1
      %p400 = por %p398, %p399
      %p402 = scmp.ne.s32.totalorder %s385, %s401
      %p403 = scmp.eq.s32.totalorder %s33, 0
      %p404 = por %p402, %p403
      %s405 = ssub.s32 %s27, %s34
      %p406 = scmp.eq.s32.totalorder %s405, 0
      %s408 = sadd.s32 %s407, 1
      %s409 = scalar_select %p406, %s407, %s408
      %p412 = pneg %p406
      %p413 = scmp.eq.s32.totalorder %s27, 1
      %p414 = por %p412, %p413
      %p415 = scmp.ne.s32.totalorder %s407, %s410
      %p416 = scmp.eq.s32.totalorder %s27, 0
      %p417 = por %p415, %p416
      %p418 = scmp.ne.s32.totalorder %s407, %s410
      %p419 = scmp.eq.s32.totalorder %s32, 1
      %p420 = por %p418, %p419
      %p421 = scmp.ne.s32.totalorder %s410, %s411
      %p422 = scmp.eq.s32.totalorder %s32, 0
      %p423 = por %p421, %p422
      %p424 = scmp.ne.s32.totalorder %s410, %s411
      %p425 = scmp.eq.s32.totalorder %s33, 1
      %p426 = por %p424, %p425
      %p428 = scmp.ne.s32.totalorder %s411, %s427
      %p429 = scmp.eq.s32.totalorder %s33, 0
      %p430 = por %p428, %p429
      %s431 = ssub.s32 %s27, %s34
      %p432 = scmp.eq.s32.totalorder %s431, 0
      %s434 = sadd.s32 %s433, 1
      %s435 = scalar_select %p432, %s433, %s434
      %p438 = pneg %p432
      %p439 = scmp.eq.s32.totalorder %s27, 1
      %p440 = por %p438, %p439
      %p441 = scmp.ne.s32.totalorder %s433, %s436
      %p442 = scmp.eq.s32.totalorder %s27, 0
      %p443 = por %p441, %p442
      %p444 = scmp.ne.s32.totalorder %s433, %s436
      %p445 = scmp.eq.s32.totalorder %s32, 1
      %p446 = por %p444, %p445
      %p447 = scmp.ne.s32.totalorder %s436, %s437
      %p448 = scmp.eq.s32.totalorder %s32, 0
      %p449 = por %p447, %p448
      %p450 = scmp.ne.s32.totalorder %s436, %s437
      %p451 = scmp.eq.s32.totalorder %s33, 1
      %p452 = por %p450, %p451
      %p454 = scmp.ne.s32.totalorder %s437, %s453
      %p455 = scmp.eq.s32.totalorder %s33, 0
      %p456 = por %p454, %p455
      %s457 = ssub.s32 %s27, %s34
      %p458 = scmp.eq.s32.totalorder %s457, 0
      %s460 = sadd.s32 %s459, 1
      %s461 = scalar_select %p458, %s459, %s460
      %p464 = pneg %p458
      %p465 = scmp.eq.s32.totalorder %s27, 1
      %p466 = por %p464, %p465
      %p467 = scmp.ne.s32.totalorder %s459, %s462
      %p468 = scmp.eq.s32.totalorder %s27, 0
      %p469 = por %p467, %p468
      %p470 = scmp.ne.s32.totalorder %s459, %s462
      %p471 = scmp.eq.s32.totalorder %s32, 1
      %p472 = por %p470, %p471
      %p473 = scmp.ne.s32.totalorder %s462, %s463
      %p474 = scmp.eq.s32.totalorder %s32, 0
      %p475 = por %p473, %p474
      %p476 = scmp.ne.s32.totalorder %s462, %s463
      %p477 = scmp.eq.s32.totalorder %s33, 1
      %p478 = por %p476, %p477
      %p480 = scmp.ne.s32.totalorder %s463, %s479
      %p481 = scmp.eq.s32.totalorder %s33, 0
      %p482 = por %p480, %p481
      %s483 = ssub.s32 %s27, %s34
      %p484 = scmp.eq.s32.totalorder %s483, 0
      %s486 = sadd.s32 %s485, 1
      %s487 = scalar_select %p484, %s485, %s486
      %p490 = pneg %p484
      %p491 = scmp.eq.s32.totalorder %s27, 1
      %p492 = por %p490, %p491
      %p493 = scmp.ne.s32.totalorder %s485, %s488
      %p494 = scmp.eq.s32.totalorder %s27, 0
      %p495 = por %p493, %p494
      %p496 = scmp.ne.s32.totalorder %s485, %s488
      %p497 = scmp.eq.s32.totalorder %s32, 1
      %p498 = por %p496, %p497
      %p499 = scmp.ne.s32.totalorder %s488, %s489
      %p500 = scmp.eq.s32.totalorder %s32, 0
      %p501 = por %p499, %p500
      %p502 = scmp.ne.s32.totalorder %s488, %s489
      %p503 = scmp.eq.s32.totalorder %s33, 1
      %p504 = por %p502, %p503
      %p506 = scmp.ne.s32.totalorder %s489, %s505
      %p507 = scmp.eq.s32.totalorder %s33, 0
      %p508 = por %p506, %p507
      %s509 = ssub.s32 %s27, %s34
      %p510 = scmp.eq.s32.totalorder %s509, 0
      %s512 = sadd.s32 %s511, 1
      %s513 = scalar_select %p510, %s511, %s512
      %p516 = pneg %p510
      %p517 = scmp.eq.s32.totalorder %s27, 1
      %p518 = por %p516, %p517
      %p519 = scmp.ne.s32.totalorder %s511, %s514
      %p520 = scmp.eq.s32.totalorder %s27, 0
      %p521 = por %p519, %p520
      %p522 = scmp.ne.s32.totalorder %s511, %s514
      %p523 = scmp.eq.s32.totalorder %s32, 1
      %p524 = por %p522, %p523
      %p525 = scmp.ne.s32.totalorder %s514, %s515
      %p526 = scmp.eq.s32.totalorder %s32, 0
      %p527 = por %p525, %p526
      %p528 = scmp.ne.s32.totalorder %s514, %s515
      %p529 = scmp.eq.s32.totalorder %s33, 1
      %p530 = por %p528, %p529
      %p532 = scmp.ne.s32.totalorder %s515, %s531
      %p533 = scmp.eq.s32.totalorder %s33, 0
      %p534 = por %p532, %p533
      %s536 = sadd.s32 %s535, 1
      %p539 = scmp.eq.s32.totalorder %s27, 1
      %p540 = scmp.ne.s32.totalorder %s535, %s537
      %p541 = scmp.eq.s32.totalorder %s27, 0
      %p542 = por %p540, %p541
      %p543 = scmp.ne.s32.totalorder %s535, %s537
      %p544 = scmp.eq.s32.totalorder %s32, 1
      %p545 = por %p543, %p544
      %p546 = scmp.ne.s32.totalorder %s537, %s538
      %p547 = scmp.eq.s32.totalorder %s32, 0
      %p548 = por %p546, %p547
      %p549 = scmp.ne.s32.totalorder %s537, %s538
      %p550 = scmp.eq.s32.totalorder %s33, 1
      %p551 = por %p549, %p550
      %p553 = scmp.ne.s32.totalorder %s538, %s552
      %p554 = scmp.eq.s32.totalorder %s33, 0
      %p555 = por %p553, %p554
      %p556 = scmp.le.s32.totalorder 1, %s27
      %p557 = scmp.lt.s32.totalorder %s27, 3
      %p558 = pnand %p556, %p557
      %p559 = pneg %p558
      // Predicated region
      $region9: #{tpu_custom_call.1} parent=5 // pred_check
        _
      $region10: #{tpu_custom_call.1} parent=5 // pred_check_branch
        %561 = sbr.rel (%p558) target = $region12
      $region11: #{tpu_custom_call.1} parent=5 // pred_region
        %s562 = ssub.s32 %s27, 1
        // Predicated region
        $region13: #{tpu_custom_call.1} parent=11 // pred_check
          %p563 = pneg %p48
        $region14: #{tpu_custom_call.1} parent=11 // pred_check_branch
          %565 = sbr.rel (%p563) target = $region16
        $region15: #{tpu_custom_call.1} parent=11 // pred_region
          _
        $region16: #{tpu_custom_call.1} parent=11 // pred_fallthru
          _
        // Predicated region
        $region17: #{tpu_custom_call.1} parent=11 // pred_check
          %p566 = pneg %p69
        $region18: #{tpu_custom_call.1} parent=11 // pred_check_branch
          %568 = sbr.rel (%p566) target = $region20
        $region19: #{tpu_custom_call.1} parent=11 // pred_region
          _
        $region20: #{tpu_custom_call.1} parent=11 // pred_fallthru
          _
        // Predicated region
        $region21: #{tpu_custom_call.1} parent=11 // pred_check
          %p569 = pneg %p90
        $region22: #{tpu_custom_call.1} parent=11 // pred_check_branch
          %571 = sbr.rel (%p569) target = $region24
        $region23: #{tpu_custom_call.1} parent=11 // pred_region
          _
        $region24: #{tpu_custom_call.1} parent=11 // pred_fallthru
          _
        // Predicated region
        $region25: #{tpu_custom_call.1} parent=11 // pred_check
          %p572 = pneg %p111
        $region26: #{tpu_custom_call.1} parent=11 // pred_check_branch
          %574 = sbr.rel (%p572) target = $region28
        $region27: #{tpu_custom_call.1} parent=11 // pred_region
          _
        $region28: #{tpu_custom_call.1} parent=11 // pred_fallthru
          _
      $region12: #{tpu_custom_call.1} parent=5 // pred_fallthru
        _
      %p575 = scmp.lt.s32.totalorder %s27, 2
      // Predicated region
      $region29: #{tpu_custom_call.1} parent=5 // pred_check
        %p576 = pneg %p575
      $region30: #{tpu_custom_call.1} parent=5 // pred_check_branch
        %578 = sbr.rel (%p576) target = $region32
      $region31: #{tpu_custom_call.1} parent=5 // pred_region
        // Predicated region
        $region33: #{tpu_custom_call.1} parent=31 // pred_check
          %p579 = pneg %p131
        $region34: #{tpu_custom_call.1} parent=31 // pred_check_branch
          %581 = sbr.rel (%p579) target = $region36
        $region35: #{tpu_custom_call.1} parent=31 // pred_region
          %p582 = scmp.lt.s32.totalorder %s27, 1
          %s583 = scalar_select %p582, %s27, 1
          %s584 = smul.addr %s583, 8
          %s585 = smul.addr %s584, 4
          %s586 = scalar_lea.vmem %s4, %s585
        $region36: #{tpu_custom_call.1} parent=31 // pred_fallthru
          _
        // Predicated region
        $region37: #{tpu_custom_call.1} parent=31 // pred_check
          %p587 = pneg %p157
        $region38: #{tpu_custom_call.1} parent=31 // pred_check_branch
          %589 = sbr.rel (%p587) target = $region40
        $region39: #{tpu_custom_call.1} parent=31 // pred_region
          %p590 = scmp.lt.s32.totalorder %s27, 1
          %s591 = scalar_select %p590, %s27, 1
          %s592 = smul.addr %s591, 2
          %s593 = scalar_lea.vmem %s5, %s592
        $region40: #{tpu_custom_call.1} parent=31 // pred_fallthru
          _
        // Predicated region
        $region41: #{tpu_custom_call.1} parent=31 // pred_check
          %p594 = pneg %p183
        $region42: #{tpu_custom_call.1} parent=31 // pred_check_branch
          %596 = sbr.rel (%p594) target = $region44
        $region43: #{tpu_custom_call.1} parent=31 // pred_region
          %p597 = scmp.lt.s32.totalorder %s27, 1
          %s598 = scalar_select %p597, %s27, 1
          %s599 = smul.addr %s598, 8
          %s600 = smul.addr %s599, 4
          %s601 = scalar_lea.vmem %s6, %s600
        $region44: #{tpu_custom_call.1} parent=31 // pred_fallthru
          _
        // Predicated region
        $region45: #{tpu_custom_call.1} parent=31 // pred_check
          %p602 = pneg %p209
        $region46: #{tpu_custom_call.1} parent=31 // pred_check_branch
          %604 = sbr.rel (%p602) target = $region48
        $region47: #{tpu_custom_call.1} parent=31 // pred_region
          %p605 = scmp.lt.s32.totalorder %s27, 1
          %s606 = scalar_select %p605, %s27, 1
          %s607 = smul.addr %s606, 2
          %s608 = scalar_lea.vmem %s7, %s607
        $region48: #{tpu_custom_call.1} parent=31 // pred_fallthru
          _
        // Predicated region
        $region49: #{tpu_custom_call.1} parent=31 // pred_check
          %p609 = pneg %p235
        $region50: #{tpu_custom_call.1} parent=31 // pred_check_branch
          %611 = sbr.rel (%p609) target = $region52
        $region51: #{tpu_custom_call.1} parent=31 // pred_region
          %p612 = scmp.lt.s32.totalorder %s27, 1
          %s613 = scalar_select %p612, %s27, 1
          %s614 = smul.addr %s613, 8
          %s615 = smul.addr %s614, 4
          %s616 = scalar_lea.vmem %s8, %s615
        $region52: #{tpu_custom_call.1} parent=31 // pred_fallthru
          _
        // Predicated region
        $region53: #{tpu_custom_call.1} parent=31 // pred_check
          %p617 = pneg %p261
        $region54: #{tpu_custom_call.1} parent=31 // pred_check_branch
          %619 = sbr.rel (%p617) target = $region56
        $region55: #{tpu_custom_call.1} parent=31 // pred_region
          %p620 = scmp.lt.s32.totalorder %s27, 1
          %s621 = scalar_select %p620, %s27, 1
          %s622 = smul.addr %s621, 2
          %s623 = scalar_lea.vmem %s9, %s622
        $region56: #{tpu_custom_call.1} parent=31 // pred_fallthru
          _
        // Predicated region
        $region57: #{tpu_custom_call.1} parent=31 // pred_check
          %p624 = pneg %p287
        $region58: #{tpu_custom_call.1} parent=31 // pred_check_branch
          %626 = sbr.rel (%p624) target = $region60
        $region59: #{tpu_custom_call.1} parent=31 // pred_region
          %p627 = scmp.lt.s32.totalorder %s27, 1
          %s628 = scalar_select %p627, %s27, 1
          %s629 = smul.addr %s628, 4
          %s630 = smul.addr %s629, 4
          %s631 = scalar_lea.vmem %s10, %s630
        $region60: #{tpu_custom_call.1} parent=31 // pred_fallthru
          _
        // Predicated region
        $region61: #{tpu_custom_call.1} parent=31 // pred_check
          %p632 = pneg %p313
        $region62: #{tpu_custom_call.1} parent=31 // pred_check_branch
          %634 = sbr.rel (%p632) target = $region64
        $region63: #{tpu_custom_call.1} parent=31 // pred_region
          %p635 = scmp.lt.s32.totalorder %s27, 1
          %s636 = scalar_select %p635, %s27, 1
          %s637 = scalar_lea.vmem %s11, %s636
        $region64: #{tpu_custom_call.1} parent=31 // pred_fallthru
          _
        // Predicated region
        $region65: #{tpu_custom_call.1} parent=31 // pred_check
          %p638 = pneg %p339
        $region66: #{tpu_custom_call.1} parent=31 // pred_check_branch
          %640 = sbr.rel (%p638) target = $region68
        $region67: #{tpu_custom_call.1} parent=31 // pred_region
          %p641 = scmp.lt.s32.totalorder %s27, 1
          %s642 = scalar_select %p641, %s27, 1
          %s643 = scalar_lea.vmem %s12, %s642
        $region68: #{tpu_custom_call.1} parent=31 // pred_fallthru
          _
        // Predicated region
        $region69: #{tpu_custom_call.1} parent=31 // pred_check
          %p644 = pneg %p365
        $region70: #{tpu_custom_call.1} parent=31 // pred_check_branch
          %646 = sbr.rel (%p644) target = $region72
        $region71: #{tpu_custom_call.1} parent=31 // pred_region
          %p647 = scmp.lt.s32.totalorder %s27, 1
          %s648 = scalar_select %p647, %s27, 1
          %s649 = scalar_lea.vmem %s13, %s648
        $region72: #{tpu_custom_call.1} parent=31 // pred_fallthru
          _
        // Predicated region
        $region73: #{tpu_custom_call.1} parent=31 // pred_check
          %p650 = pneg %p391
        $region74: #{tpu_custom_call.1} parent=31 // pred_check_branch
          %652 = sbr.rel (%p650) target = $region76
        $region75: #{tpu_custom_call.1} parent=31 // pred_region
          %p653 = scmp.lt.s32.totalorder %s27, 1
          %s654 = scalar_select %p653, %s27, 1
          %s655 = smul.addr %s654, 4
          %s656 = smul.addr %s655, 4
          %s657 = scalar_lea.vmem %s14, %s656
        $region76: #{tpu_custom_call.1} parent=31 // pred_fallthru
          _
        // Predicated region
        $region77: #{tpu_custom_call.1} parent=31 // pred_check
          %p658 = pneg %p417
        $region78: #{tpu_custom_call.1} parent=31 // pred_check_branch
          %660 = sbr.rel (%p658) target = $region80
        $region79: #{tpu_custom_call.1} parent=31 // pred_region
          %p661 = scmp.lt.s32.totalorder %s27, 1
          %s662 = scalar_select %p661, %s27, 1
          %s663 = scalar_lea.vmem %s15, %s662
        $region80: #{tpu_custom_call.1} parent=31 // pred_fallthru
          _
        // Predicated region
        $region81: #{tpu_custom_call.1} parent=31 // pred_check
          %p664 = pneg %p443
        $region82: #{tpu_custom_call.1} parent=31 // pred_check_branch
          %666 = sbr.rel (%p664) target = $region84
        $region83: #{tpu_custom_call.1} parent=31 // pred_region
          %p667 = scmp.lt.s32.totalorder %s27, 1
          %s668 = scalar_select %p667, %s27, 1
          %s669 = smul.addr %s668, 8
          %s670 = smul.addr %s669, 4
          %s671 = scalar_lea.vmem %s16, %s670
        $region84: #{tpu_custom_call.1} parent=31 // pred_fallthru
          _
        // Predicated region
        $region85: #{tpu_custom_call.1} parent=31 // pred_check
          %p672 = pneg %p469
        $region86: #{tpu_custom_call.1} parent=31 // pred_check_branch
          %674 = sbr.rel (%p672) target = $region88
        $region87: #{tpu_custom_call.1} parent=31 // pred_region
          %p675 = scmp.lt.s32.totalorder %s27, 1
          %s676 = scalar_select %p675, %s27, 1
          %s677 = scalar_lea.vmem %s17, %s676
        $region88: #{tpu_custom_call.1} parent=31 // pred_fallthru
          _
        // Predicated region
        $region89: #{tpu_custom_call.1} parent=31 // pred_check
          %p678 = pneg %p495
        $region90: #{tpu_custom_call.1} parent=31 // pred_check_branch
          %680 = sbr.rel (%p678) target = $region92
        $region91: #{tpu_custom_call.1} parent=31 // pred_region
          %p681 = scmp.lt.s32.totalorder %s27, 1
          %s682 = scalar_select %p681, %s27, 1
          %s683 = scalar_lea.vmem %s18, %s682
        $region92: #{tpu_custom_call.1} parent=31 // pred_fallthru
          _
        // Predicated region
        $region93: #{tpu_custom_call.1} parent=31 // pred_check
          %p684 = pneg %p521
        $region94: #{tpu_custom_call.1} parent=31 // pred_check_branch
          %686 = sbr.rel (%p684) target = $region96
        $region95: #{tpu_custom_call.1} parent=31 // pred_region
          %p687 = scmp.lt.s32.totalorder %s27, 1
          %s688 = scalar_select %p687, %s27, 1
          %s689 = scalar_lea.vmem %s19, %s688
        $region96: #{tpu_custom_call.1} parent=31 // pred_fallthru
          _
      $region32: #{tpu_custom_call.1} parent=5 // pred_fallthru
        _
      %p690 = scmp.le.s32.totalorder 1, %s27
      %p691 = scmp.lt.s32.totalorder %s27, 3
      %p692 = pnand %p690, %p691
      %p693 = pneg %p692
      // Predicated region
      $region97: #{tpu_custom_call.1} parent=5 // pred_check
        _
      $region98: #{tpu_custom_call.1} parent=5 // pred_check_branch
        %695 = sbr.rel (%p692) target = $region100
      $region99: #{tpu_custom_call.1} parent=5 // pred_region
        %s696 = ssub.s32 %s27, 1
        %p697 = pneg %p48
        %p698 = pneg %p45
        %p699 = pneg %p69
        %p700 = pneg %p66
        %p701 = pneg %p90
        %p702 = pneg %p87
        %p703 = pneg %p111
        %p704 = pneg %p108
        %p705 = scmp.lt.s32.totalorder %s32, 1
        %s706 = scalar_select %p705, %s32, 1
        %s707 = smul.addr %s706, 8
        %s708 = smul.addr %s707, 4
        %s709 = scalar_lea.vmem %s4, %s708
        %p710 = pneg %p137
        %p711 = pneg %p134
        %p712 = scmp.lt.s32.totalorder %s32, 1
        %s713 = scalar_select %p712, %s32, 1
        %s714 = smul.addr %s713, 2
        %s715 = scalar_lea.vmem %s5, %s714
        %p716 = pneg %p163
        %p717 = pneg %p160
        %p718 = scmp.lt.s32.totalorder %s32, 1
        %s719 = scalar_select %p718, %s32, 1
        %s720 = smul.addr %s719, 8
        %s721 = smul.addr %s720, 4
        %s722 = scalar_lea.vmem %s6, %s721
        %p723 = pneg %p189
        %p724 = pneg %p186
        %p725 = scmp.lt.s32.totalorder %s32, 1
        %s726 = scalar_select %p725, %s32, 1
        %s727 = smul.addr %s726, 2
        %s728 = scalar_lea.vmem %s7, %s727
        %p729 = pneg %p215
        %p730 = pneg %p212
        %p731 = scmp.lt.s32.totalorder %s32, 1
        %s732 = scalar_select %p731, %s32, 1
        %s733 = smul.addr %s732, 8
        %s734 = smul.addr %s733, 4
        %s735 = scalar_lea.vmem %s8, %s734
        %p736 = pneg %p241
        %p737 = pneg %p238
        %p738 = scmp.lt.s32.totalorder %s32, 1
        %s739 = scalar_select %p738, %s32, 1
        %s740 = smul.addr %s739, 2
        %s741 = scalar_lea.vmem %s9, %s740
        %p742 = pneg %p267
        %p743 = pneg %p264
        %p744 = scmp.lt.s32.totalorder %s32, 1
        %s745 = scalar_select %p744, %s32, 1
        %s746 = smul.addr %s745, 4
        %s747 = smul.addr %s746, 4
        %s748 = scalar_lea.vmem %s10, %s747
        %p749 = pneg %p293
        %p750 = pneg %p290
        %p751 = scmp.lt.s32.totalorder %s32, 1
        %s752 = scalar_select %p751, %s32, 1
        %s753 = scalar_lea.vmem %s11, %s752
        %p754 = pneg %p319
        %p755 = pneg %p316
        %p756 = scmp.lt.s32.totalorder %s32, 1
        %s757 = scalar_select %p756, %s32, 1
        %s758 = scalar_lea.vmem %s12, %s757
        %p759 = pneg %p345
        %p760 = pneg %p342
        %p761 = scmp.lt.s32.totalorder %s32, 1
        %s762 = scalar_select %p761, %s32, 1
        %s763 = scalar_lea.vmem %s13, %s762
        %p764 = pneg %p371
        %p765 = pneg %p368
        %p766 = scmp.lt.s32.totalorder %s32, 1
        %s767 = scalar_select %p766, %s32, 1
        %s768 = smul.addr %s767, 4
        %s769 = smul.addr %s768, 4
        %s770 = scalar_lea.vmem %s14, %s769
        %p771 = pneg %p397
        %p772 = pneg %p394
        %p773 = scmp.lt.s32.totalorder %s32, 1
        %s774 = scalar_select %p773, %s32, 1
        %s775 = scalar_lea.vmem %s15, %s774
        %p776 = pneg %p423
        %p777 = pneg %p420
        %p778 = scmp.lt.s32.totalorder %s32, 1
        %s779 = scalar_select %p778, %s32, 1
        %s780 = smul.addr %s779, 8
        %s781 = smul.addr %s780, 4
        %s782 = scalar_lea.vmem %s16, %s781
        %p783 = pneg %p449
        %p784 = pneg %p446
        %p785 = scmp.lt.s32.totalorder %s32, 1
        %s786 = scalar_select %p785, %s32, 1
        %s787 = scalar_lea.vmem %s17, %s786
        %p788 = pneg %p475
        %p789 = pneg %p472
        %p790 = scmp.lt.s32.totalorder %s32, 1
        %s791 = scalar_select %p790, %s32, 1
        %s792 = scalar_lea.vmem %s18, %s791
        %p793 = pneg %p501
        %p794 = pneg %p498
        %p795 = scmp.lt.s32.totalorder %s32, 1
        %s796 = scalar_select %p795, %s32, 1
        %s797 = scalar_lea.vmem %s19, %s796
        %p798 = pneg %p527
        %p799 = pneg %p524
        %p800 = pneg %p548
        %p801 = pneg %p545
        %p802 = scmp.lt.s32.totalorder %s32, 1
        %s803 = scalar_select %p802, %s32, 1
        %s804 = smul.addr %s803, 8
        %s805 = smul.addr %s804, 4
        %s806 = scalar_lea.vmem %s4, %s805
        %p807 = scmp.lt.s32.totalorder %s32, 1
        %s808 = scalar_select %p807, %s32, 1
        %s809 = smul.addr %s808, 2
        %s810 = scalar_lea.vmem %s5, %s809
        %p811 = scmp.lt.s32.totalorder %s32, 1
        %s812 = scalar_select %p811, %s32, 1
        %s813 = smul.addr %s812, 8
        %s814 = smul.addr %s813, 4
        %s815 = scalar_lea.vmem %s6, %s814
        %p816 = scmp.lt.s32.totalorder %s32, 1
        %s817 = scalar_select %p816, %s32, 1
        %s818 = smul.addr %s817, 2
        %s819 = scalar_lea.vmem %s7, %s818
        %p820 = scmp.lt.s32.totalorder %s32, 1
        %s821 = scalar_select %p820, %s32, 1
        %s822 = smul.addr %s821, 8
        %s823 = smul.addr %s822, 4
        %s824 = scalar_lea.vmem %s8, %s823
        %p825 = scmp.lt.s32.totalorder %s32, 1
        %s826 = scalar_select %p825, %s32, 1
        %s827 = smul.addr %s826, 2
        %s828 = scalar_lea.vmem %s9, %s827
        %p829 = scmp.lt.s32.totalorder %s32, 1
        %s830 = scalar_select %p829, %s32, 1
        %s831 = smul.addr %s830, 4
        %s832 = smul.addr %s831, 4
        %s833 = scalar_lea.vmem %s10, %s832
        %p834 = scmp.lt.s32.totalorder %s32, 1
        %s835 = scalar_select %p834, %s32, 1
        %s836 = scalar_lea.vmem %s11, %s835
        %p837 = scmp.lt.s32.totalorder %s32, 1
        %s838 = scalar_select %p837, %s32, 1
        %s839 = scalar_lea.vmem %s12, %s838
        %p840 = scmp.lt.s32.totalorder %s32, 1
        %s841 = scalar_select %p840, %s32, 1
        %s842 = scalar_lea.vmem %s13, %s841
        %p843 = scmp.lt.s32.totalorder %s32, 1
        %s844 = scalar_select %p843, %s32, 1
        %s845 = smul.addr %s844, 4
        %s846 = smul.addr %s845, 4
        %s847 = scalar_lea.vmem %s14, %s846
        %p848 = scmp.lt.s32.totalorder %s32, 1
        %s849 = scalar_select %p848, %s32, 1
        %s850 = scalar_lea.vmem %s15, %s849
        %p851 = scmp.lt.s32.totalorder %s32, 1
        %s852 = scalar_select %p851, %s32, 1
        %s853 = smul.addr %s852, 8
        %s854 = smul.addr %s853, 4
        %s855 = scalar_lea.vmem %s16, %s854
        %p856 = scmp.lt.s32.totalorder %s32, 1
        %s857 = scalar_select %p856, %s32, 1
        %s858 = scalar_lea.vmem %s17, %s857
        %p859 = scmp.lt.s32.totalorder %s32, 1
        %s860 = scalar_select %p859, %s32, 1
        %s861 = scalar_lea.vmem %s18, %s860
        %p862 = scmp.lt.s32.totalorder %s32, 1
        %s863 = scalar_select %p862, %s32, 1
        %s864 = scalar_lea.vmem %s19, %s863
        %p866 = scmp.eq.s32.totalorder %s32, 0
        // Predicated region
        $region101: #{tpu_custom_call.1} parent=99 // pred_check
          %p867 = pneg %p866
        $region102: #{tpu_custom_call.1} parent=99 // pred_check_branch
          %869 = sbr.rel (%p867) target = $region104
        $region103: #{tpu_custom_call.1} parent=99 // pred_region
          %v870 = vld [vmem:[%s1] sm:$0xff]
          %v871 = vld [vmem:[%s1 + $0x8] sm:$0xff]
          %v872 = vld [vmem:[%s2] sm:$0x1]
          %v873 = vld [vmem:[%s3] sm:$0x1]
          %vm874 = vcmask 261120
          %v875 = vsel %vm874, %v870, 0.0
          %876 = vadd.xlane.f32.xlu0 %v875
          %v877 = vpop.xlane.xlu0 %876
          %v878 = vsel %vm874, %v871, 0.0
          %879 = vadd.xlane.f32.xlu0 %v878
          %v880 = vpop.xlane.xlu0 %879
          %v881 = vrcp.pop 32.0
          %v882 = vmul.f32 %v877, %v881
          %v883 = vmul.f32 %v880, %v881
          %v884 = vsub.f32 %v870, %v882
          %v885 = vsub.f32 %v871, %v883
          %v886 = vmul.f32 %v884, %v884
          %v887 = vmul.f32 %v885, %v885
          %v888 = vsel %vm874, %v886, 0.0
          %889 = vadd.xlane.f32.xlu0 %v888
          %v890 = vpop.xlane.xlu0 %889
          %v891 = vsel %vm874, %v887, 0.0
          %892 = vadd.xlane.f32.xlu0 %v891
          %v893 = vpop.xlane.xlu0 %892
          %v894 = vmul.f32 %v890, %v881
          %v895 = vmul.f32 %v893, %v881
          %v896 = vadd.f32 %v894, 1e-12
          %v897 = vadd.f32 %v895, 1e-12
          %v898 = vrsqrt.pop %v896
          %v899 = vrsqrt.pop %v897
          %v900 = vmul.f32 %v884, %v898
          %v901 = vmul.f32 %v885, %v899
          %v903 = vlaneseq
          %v904 = vshrl.u32 %v903, 7
          %v905 = vsub.s32 0, %v904
          %v906 = vrot.slane %v872, %v905
          %v908 = vmul.f32 %v900, %v906
          %v909 = vmul.f32 %v901, %v906
          %v911 = vlaneseq
          %v912 = vshrl.u32 %v911, 7
          %v913 = vsub.s32 0, %v912
          %v914 = vrot.slane %v873, %v913
          %v916 = vadd.f32 %v908, %v914
          %v917 = vadd.f32 %v909, %v914
          %918 = vst.msk [vmem:[#allocation2] sm:$0xff] %vm874, %v916
          %919 = vst.msk [vmem:[#allocation2 + $0x8] sm:$0xff] %vm874, %v917
        $region104: #{tpu_custom_call.1} parent=99 // pred_fallthru
          _
        %v920 = vld [vmem:[%s0] sm:$0x3]
        %v921 = vsub.f32 %v920, 1.0
        %v922 = vmul.f32 %v921, 1e+09
        %v925 = vunpack.c.l.s4 1966171168
        %v926 = vunpack.c.0.s8 %v925
        %v927 = vlaneseq
        %v928 = vshrl.u32 %v927, 7
        %v929 = vsub.s32 %v926, %v928
        %v930 = vrot.slane %v922, %v929
        %v931 = vcombine.high %v930, %v930
        %v933 = vunpack.c.l.s4 1966171168
        %v934 = vunpack.c.0.s8 %v933
        %v935 = vlaneseq
        %v936 = vshrl.u32 %v935, 7
        %v937 = vsub.s32 %v934, %v936
        %v938 = vrot.slane %v930, %v937
        %v940 = vunpack.c.l.s4 1966171168
        %v941 = vunpack.c.0.s8 %v940
        %v942 = vlaneseq
        %v943 = vshrl.u32 %v942, 7
        %v944 = vsub.s32 %v941, %v943
        %v945 = vrot.slane %v931, %v944
        %v946 = vld [vmem:[#allocation2] sm:$0xff]
        %v947 = vld [vmem:[#allocation2 + $0x8] sm:$0xff]
        %v948 = vpack.c.bf16 %v946, %v946
        %v949 = vpack.c.bf16 %v947, %v947
        %v950 = vld [vmem:[%s806] sm:$0xf]
        %v951 = vld [vmem:[%s806 + $0x4] sm:$0xf]
        %v952 = vld [vmem:[%s806 + $0x8] sm:$0xf]
        %v953 = vld [vmem:[%s806 + $0xc] sm:$0xf]
        %v954 = vld [vmem:[%s810] sm:$0x1]
        %v956 = vlaneseq
        %v957 = vshrl.u32 %v956, 7
        %v958 = vsub.s32 0, %v957
        %v959 = vrot.slane %v954, %v958
        %v963 = vunpack.c.l.b16 %v948
        %v964 = vunpack.c.l.b16 %v949
        %v965 = vpack.c.b16 %v964, %v963
        %v970 = vunpack.c.l.b16 %v950
        %v971 = vunpack.c.l.b16 %v951
        %v972 = vunpack.c.l.b16 %v952
        %v973 = vunpack.c.l.b16 %v953
        %v974 = vpack.c.b16 %v971, %v970
        %v975 = vpack.c.b16 %v973, %v972
        %vm978 = vcmask 261120
        %v980 = vsel %vm978, %v965, 0
        %982 = vmatprep.subr.bf16.mxu0 0
        %983 = vmatpush1.bf16.msra.mxu0 %v974
        %984 = vmatprep.subr.bf16.mxu0 0
        %985 = vmatpush1.bf16.msra.mxu0 %v975
        %986 = vmatprep.subr.bf16.mxu0 0
        %987 = vmatpush1.bf16.msra.mxu0 0
        %988 = vmatprep.subr.bf16.mxu0 0
        %989 = vmatpush1.bf16.msra.mxu0 0
        %990 = vmatprep.subr.bf16.mxu0 0
        %991 = vmatpush1.bf16.msra.mxu0 0
        %992 = vmatprep.subr.bf16.mxu0 0
        %993 = vmatpush1.bf16.msra.mxu0 0
        %994 = vmatprep.subr.bf16.mxu0 0
        %995 = vmatpush1.bf16.msra.mxu0 0
        %996 = vmatprep.subr.bf16.mxu0 0
        %997 = vmatpush1.bf16.msra.mxu0 0
        %998 = vmatprep.subr.bf16.mxu0 0
        %999 = vmatpush1.bf16.msra.mxu0 0
        %1000 = vmatprep.subr.bf16.mxu0 0
        %1001 = vmatpush1.bf16.msra.mxu0 0
        %1002 = vmatprep.subr.bf16.mxu0 0
        %1003 = vmatpush1.bf16.msra.mxu0 0
        %1004 = vmatprep.subr.bf16.mxu0 0
        %1005 = vmatpush1.bf16.msra.mxu0 0
        %1006 = vmatprep.subr.bf16.mxu0 0
        %1007 = vmatpush1.bf16.msra.mxu0 0
        %1008 = vmatprep.subr.bf16.mxu0 0
        %1009 = vmatpush1.bf16.msra.mxu0 0
        %1010 = vmatprep.subr.bf16.mxu0 0
        %1011 = vmatpush1.bf16.msra.mxu0 0
        %1012 = vmatprep.subr.bf16.mxu0 0
        %1013 = vmatpush1.bf16.msra.mxu0 0
        %1014 = vmatprep.mubr.bf16.mxu0 0
        %1015 = vmatmul.mubr.bf16.gmra.mrb[0].mxu0 %v980
        %v1016 = vpop.f32.mrb[0].mxu0
        %v1017 = vadd.f32 %v959, %v1016
        %v1018 = vpop.f32.mrb[0].mxu0
        %v1019 = vpop.f32.mrb[0].mxu0
        %v1020 = vadd.f32 %v959, %v1019
        %v1021 = vpop.f32.mrb[0].mxu0
        %1022 = vdwg.mxu0
        %v1023 = vld [vmem:[%s815] sm:$0xf]
        %v1024 = vld [vmem:[%s815 + $0x4] sm:$0xf]
        %v1025 = vld [vmem:[%s815 + $0x8] sm:$0xf]
        %v1026 = vld [vmem:[%s815 + $0xc] sm:$0xf]
        %v1027 = vld [vmem:[%s819] sm:$0x1]
        %v1029 = vlaneseq
        %v1030 = vshrl.u32 %v1029, 7
        %v1031 = vsub.s32 0, %v1030
        %v1032 = vrot.slane %v1027, %v1031
        %v1038 = vunpack.c.l.b16 %v1023
        %v1039 = vunpack.c.l.b16 %v1024
        %v1040 = vunpack.c.l.b16 %v1025
        %v1041 = vunpack.c.l.b16 %v1026
        %v1042 = vpack.c.b16 %v1039, %v1038
        %v1043 = vpack.c.b16 %v1041, %v1040
        %1046 = vmatprep.subr.bf16.mxu0 0
        %1047 = vmatpush1.bf16.msra.mxu0 %v1042
        %1048 = vmatprep.subr.bf16.mxu0 0
        %1049 = vmatpush1.bf16.msra.mxu0 %v1043
        %1050 = vmatprep.subr.bf16.mxu0 0
        %1051 = vmatpush1.bf16.msra.mxu0 0
        %1052 = vmatprep.subr.bf16.mxu0 0
        %1053 = vmatpush1.bf16.msra.mxu0 0
        %1054 = vmatprep.subr.bf16.mxu0 0
        %1055 = vmatpush1.bf16.msra.mxu0 0
        %1056 = vmatprep.subr.bf16.mxu0 0
        %1057 = vmatpush1.bf16.msra.mxu0 0
        %1058 = vmatprep.subr.bf16.mxu0 0
        %1059 = vmatpush1.bf16.msra.mxu0 0
        %1060 = vmatprep.subr.bf16.mxu0 0
        %1061 = vmatpush1.bf16.msra.mxu0 0
        %1062 = vmatprep.subr.bf16.mxu0 0
        %1063 = vmatpush1.bf16.msra.mxu0 0
        %1064 = vmatprep.subr.bf16.mxu0 0
        %1065 = vmatpush1.bf16.msra.mxu0 0
        %1066 = vmatprep.subr.bf16.mxu0 0
        %1067 = vmatpush1.bf16.msra.mxu0 0
        %1068 = vmatprep.subr.bf16.mxu0 0
        %1069 = vmatpush1.bf16.msra.mxu0 0
        %1070 = vmatprep.subr.bf16.mxu0 0
        %1071 = vmatpush1.bf16.msra.mxu0 0
        %1072 = vmatprep.subr.bf16.mxu0 0
        %1073 = vmatpush1.bf16.msra.mxu0 0
        %1074 = vmatprep.subr.bf16.mxu0 0
        %1075 = vmatpush1.bf16.msra.mxu0 0
        %1076 = vmatprep.subr.bf16.mxu0 0
        %1077 = vmatpush1.bf16.msra.mxu0 0
        %1078 = vmatprep.mubr.bf16.mxu0 0
        %1079 = vmatmul.mubr.bf16.gmra.mrb[0].mxu0 %v980
        %v1080 = vpop.f32.mrb[0].mxu0
        %v1081 = vadd.f32 %v1032, %v1080
        %v1082 = vpop.f32.mrb[0].mxu0
        %v1083 = vpop.f32.mrb[0].mxu0
        %v1084 = vadd.f32 %v1032, %v1083
        %v1085 = vpop.f32.mrb[0].mxu0
        %1086 = vdwg.mxu0
        %v1087 = vld [vmem:[%s824] sm:$0xf]
        %v1088 = vld [vmem:[%s824 + $0x4] sm:$0xf]
        %v1089 = vld [vmem:[%s824 + $0x8] sm:$0xf]
        %v1090 = vld [vmem:[%s824 + $0xc] sm:$0xf]
        %v1091 = vld [vmem:[%s828] sm:$0x1]
        %v1093 = vlaneseq
        %v1094 = vshrl.u32 %v1093, 7
        %v1095 = vsub.s32 0, %v1094
        %v1096 = vrot.slane %v1091, %v1095
        %v1102 = vunpack.c.l.b16 %v1087
        %v1103 = vunpack.c.l.b16 %v1088
        %v1104 = vunpack.c.l.b16 %v1089
        %v1105 = vunpack.c.l.b16 %v1090
        %v1106 = vpack.c.b16 %v1103, %v1102
        %v1107 = vpack.c.b16 %v1105, %v1104
        %1110 = vmatprep.subr.bf16.mxu0 0
        %1111 = vmatpush1.bf16.msra.mxu0 %v1106
        %1112 = vmatprep.subr.bf16.mxu0 0
        %1113 = vmatpush1.bf16.msra.mxu0 %v1107
        %1114 = vmatprep.subr.bf16.mxu0 0
        %1115 = vmatpush1.bf16.msra.mxu0 0
        %1116 = vmatprep.subr.bf16.mxu0 0
        %1117 = vmatpush1.bf16.msra.mxu0 0
        %1118 = vmatprep.subr.bf16.mxu0 0
        %1119 = vmatpush1.bf16.msra.mxu0 0
        %1120 = vmatprep.subr.bf16.mxu0 0
        %1121 = vmatpush1.bf16.msra.mxu0 0
        %1122 = vmatprep.subr.bf16.mxu0 0
        %1123 = vmatpush1.bf16.msra.mxu0 0
        %1124 = vmatprep.subr.bf16.mxu0 0
        %1125 = vmatpush1.bf16.msra.mxu0 0
        %1126 = vmatprep.subr.bf16.mxu0 0
        %1127 = vmatpush1.bf16.msra.mxu0 0
        %1128 = vmatprep.subr.bf16.mxu0 0
        %1129 = vmatpush1.bf16.msra.mxu0 0
        %1130 = vmatprep.subr.bf16.mxu0 0
        %1131 = vmatpush1.bf16.msra.mxu0 0
        %1132 = vmatprep.subr.bf16.mxu0 0
        %1133 = vmatpush1.bf16.msra.mxu0 0
        %1134 = vmatprep.subr.bf16.mxu0 0
        %1135 = vmatpush1.bf16.msra.mxu0 0
        %1136 = vmatprep.subr.bf16.mxu0 0
        %1137 = vmatpush1.bf16.msra.mxu0 0
        %1138 = vmatprep.subr.bf16.mxu0 0
        %1139 = vmatpush1.bf16.msra.mxu0 0
        %1140 = vmatprep.subr.bf16.mxu0 0
        %1141 = vmatpush1.bf16.msra.mxu0 0
        %1142 = vmatprep.mubr.bf16.mxu0 0
        %1143 = vmatmul.mubr.bf16.gmra.mrb[0].mxu0 %v980
        %v1144 = vpop.f32.mrb[0].mxu0
        %v1145 = vadd.f32 %v1096, %v1144
        %v1146 = vpop.f32.mrb[0].mxu0
        %v1147 = vpop.f32.mrb[0].mxu0
        %v1148 = vadd.f32 %v1096, %v1147
        %v1149 = vpop.f32.mrb[0].mxu0
        %1150 = vdwg.mxu0
        %v1151 = vpack.c.bf16 %v1017, %v1017
        %v1152 = vpack.c.bf16 %v1020, %v1020
        %v1153 = vpack.c.bf16 %v1081, %v1081
        %v1154 = vpack.c.bf16 %v1084, %v1084
        %vm1155 = vcmask 130048
        %v1157 = vsel %vm1155, %v1151, 0
        %v1160 = vsel %vm1155, %v1153, 0
        %1162 = vmatprep.subr.bf16.mxu0 0
        %1163 = vmatpush1.bf16.xpose.msra.mxu0 %v1160
        %1164 = vmatprep.subr.bf16.mxu0 0
        %1165 = vmatpush1.bf16.xpose.msra.mxu0 0
        %1166 = vmatprep.subr.bf16.mxu0 0
        %1167 = vmatpush1.bf16.xpose.msra.mxu0 0
        %1168 = vmatprep.subr.bf16.mxu0 0
        %1169 = vmatpush1.bf16.xpose.msra.mxu0 0
        %1170 = vmatprep.subr.bf16.mxu0 0
        %1171 = vmatpush1.bf16.xpose.msra.mxu0 0
        %1172 = vmatprep.subr.bf16.mxu0 0
        %1173 = vmatpush1.bf16.xpose.msra.mxu0 0
        %1174 = vmatprep.subr.bf16.mxu0 0
        %1175 = vmatpush1.bf16.xpose.msra.mxu0 0
        %1176 = vmatprep.subr.bf16.mxu0 0
        %1177 = vmatpush1.bf16.xpose.msra.mxu0 0
        %1178 = vmatprep.subr.bf16.mxu0 0
        %1179 = vmatpush1.bf16.xpose.msra.mxu0 0
        %1180 = vmatprep.subr.bf16.mxu0 0
        %1181 = vmatpush1.bf16.xpose.msra.mxu0 0
        %1182 = vmatprep.subr.bf16.mxu0 0
        %1183 = vmatpush1.bf16.xpose.msra.mxu0 0
        %1184 = vmatprep.subr.bf16.mxu0 0
        %1185 = vmatpush1.bf16.xpose.msra.mxu0 0
        %1186 = vmatprep.subr.bf16.mxu0 0
        %1187 = vmatpush1.bf16.xpose.msra.mxu0 0
        %1188 = vmatprep.subr.bf16.mxu0 0
        %1189 = vmatpush1.bf16.xpose.msra.mxu0 0
        %1190 = vmatprep.subr.bf16.mxu0 0
        %1191 = vmatpush1.bf16.xpose.msra.mxu0 0
        %1192 = vmatprep.subr.bf16.mxu0 0
        %1193 = vmatpush1.bf16.xpose.msra.mxu0 0
        %1194 = vmatprep.mubr.bf16.mxu0 0
        %1195 = vmatmul.mubr.bf16.gmra.mrb[0].mxu0 %v1157
        %v1196 = vpop.f32.mrb[0].mxu0
        %v1197 = vadd.f32 0.0, %v1196
        %v1198 = vpop.f32.mrb[0].mxu0
        %v1199 = vpop.f32.mrb[0].mxu0
        %v1200 = vpop.f32.mrb[0].mxu0
        %1201 = vdwg.mxu0
        %v1203 = vsel %vm1155, %v1152, 0
        %v1206 = vsel %vm1155, %v1154, 0
        %1208 = vmatprep.subr.bf16.mxu0 0
        %1209 = vmatpush1.bf16.xpose.msra.mxu0 %v1206
        %1210 = vmatprep.subr.bf16.mxu0 0
        %1211 = vmatpush1.bf16.xpose.msra.mxu0 0
        %1212 = vmatprep.subr.bf16.mxu0 0
        %1213 = vmatpush1.bf16.xpose.msra.mxu0 0
        %1214 = vmatprep.subr.bf16.mxu0 0
        %1215 = vmatpush1.bf16.xpose.msra.mxu0 0
        %1216 = vmatprep.subr.bf16.mxu0 0
        %1217 = vmatpush1.bf16.xpose.msra.mxu0 0
        %1218 = vmatprep.subr.bf16.mxu0 0
        %1219 = vmatpush1.bf16.xpose.msra.mxu0 0
        %1220 = vmatprep.subr.bf16.mxu0 0
        %1221 = vmatpush1.bf16.xpose.msra.mxu0 0
        %1222 = vmatprep.subr.bf16.mxu0 0
        %1223 = vmatpush1.bf16.xpose.msra.mxu0 0
        %1224 = vmatprep.subr.bf16.mxu0 0
        %1225 = vmatpush1.bf16.xpose.msra.mxu0 0
        %1226 = vmatprep.subr.bf16.mxu0 0
        %1227 = vmatpush1.bf16.xpose.msra.mxu0 0
        %1228 = vmatprep.subr.bf16.mxu0 0
        %1229 = vmatpush1.bf16.xpose.msra.mxu0 0
        %1230 = vmatprep.subr.bf16.mxu0 0
        %1231 = vmatpush1.bf16.xpose.msra.mxu0 0
        %1232 = vmatprep.subr.bf16.mxu0 0
        %1233 = vmatpush1.bf16.xpose.msra.mxu0 0
        %1234 = vmatprep.subr.bf16.mxu0 0
        %1235 = vmatpush1.bf16.xpose.msra.mxu0 0
        %1236 = vmatprep.subr.bf16.mxu0 0
        %1237 = vmatpush1.bf16.xpose.msra.mxu0 0
        %1238 = vmatprep.subr.bf16.mxu0 0
        %1239 = vmatpush1.bf16.xpose.msra.mxu0 0
        %1240 = vmatprep.mubr.bf16.mxu0 0
        %1241 = vmatmul.mubr.bf16.gmra.mrb[0].mxu0 %v1203
        %v1242 = vpop.f32.mrb[0].mxu0
        %v1243 = vadd.f32 0.0, %v1242
        %v1244 = vpop.f32.mrb[0].mxu0
        %v1245 = vpop.f32.mrb[0].mxu0
        %v1246 = vpop.f32.mrb[0].mxu0
        %1247 = vdwg.mxu0
        %v1248 = vmul.f32 %v1197, 0.25
        %v1249 = vmul.f32 %v1243, 0.25
        %v1250 = vlaneseq
        %v1251 = vshrl.u32 %v1250, 7
        %v1252 = vsub.s32 0, %v1251
        %v1253 = vrot.slane %v938, %v1252
        %v1254 = vlaneseq
        %v1255 = vshrl.u32 %v1254, 7
        %v1256 = vsub.s32 0, %v1255
        %v1257 = vrot.slane %v945, %v1256
        %v1260 = vadd.f32 %v1248, %v1253
        %v1261 = vadd.f32 %v1249, %v1257
        %vm1262 = vcmask 64512
        %v1263 = vsel %vm1262, %v1260, -inf
        %1264 = vmax.xlane.f32.xlu0 %v1263
        %v1265 = vpop.xlane.xlu0 %1264
        %v1266 = vsel %vm1262, %v1261, -inf
        %1267 = vmax.xlane.f32.xlu0 %v1266
        %v1268 = vpop.xlane.xlu0 %1267
        %v1269 = vsub.f32 %v1260, %v1265
        %v1270 = vsub.f32 %v1261, %v1268
        %v1271 = vmul.f32 %v1269, 1.442695
        %v1272 = vpow.pop %v1271
        %v1273 = vmul.f32 %v1270, 1.442695
        %v1274 = vpow.pop %v1273
        %v1275 = vsel %vm1262, %v1272, 0.0
        %1276 = vadd.xlane.f32.xlu0 %v1275
        %v1277 = vpop.xlane.xlu0 %1276
        %v1278 = vsel %vm1262, %v1274, 0.0
        %1279 = vadd.xlane.f32.xlu0 %v1278
        %v1280 = vpop.xlane.xlu0 %1279
        %v1281 = vrcp.pop %v1277
        %v1282 = vrcp.pop %v1280
        %v1283 = vmul.f32 %v1272, %v1281
        %v1284 = vmul.f32 %v1274, %v1282
        %v1285 = vpack.c.bf16 %v1283, %v1283
        %v1286 = vpack.c.bf16 %v1284, %v1284
        %v1287 = vpack.c.bf16 %v1145, %v1145
        %v1288 = vpack.c.bf16 %v1148, %v1148
        %v1290 = vsel %vm1262, %v1285, 0
        %vm1292 = vcmask 1043456
        %v1294 = vsel %vm1292, %v1287, 0
        %1296 = vmatprep.subr.bf16.mxu0 0
        %1297 = vmatpush1.bf16.msra.mxu0 %v1294
        %1298 = vmatprep.subr.bf16.mxu0 0
        %1299 = vmatpush1.bf16.msra.mxu0 0
        %1300 = vmatprep.subr.bf16.mxu0 0
        %1301 = vmatpush1.bf16.msra.mxu0 0
        %1302 = vmatprep.subr.bf16.mxu0 0
        %1303 = vmatpush1.bf16.msra.mxu0 0
        %1304 = vmatprep.subr.bf16.mxu0 0
        %1305 = vmatpush1.bf16.msra.mxu0 0
        %1306 = vmatprep.subr.bf16.mxu0 0
        %1307 = vmatpush1.bf16.msra.mxu0 0
        %1308 = vmatprep.subr.bf16.mxu0 0
        %1309 = vmatpush1.bf16.msra.mxu0 0
        %1310 = vmatprep.subr.bf16.mxu0 0
        %1311 = vmatpush1.bf16.msra.mxu0 0
        %1312 = vmatprep.subr.bf16.mxu0 0
        %1313 = vmatpush1.bf16.msra.mxu0 0
        %1314 = vmatprep.subr.bf16.mxu0 0
        %1315 = vmatpush1.bf16.msra.mxu0 0
        %1316 = vmatprep.subr.bf16.mxu0 0
        %1317 = vmatpush1.bf16.msra.mxu0 0
        %1318 = vmatprep.subr.bf16.mxu0 0
        %1319 = vmatpush1.bf16.msra.mxu0 0
        %1320 = vmatprep.subr.bf16.mxu0 0
        %1321 = vmatpush1.bf16.msra.mxu0 0
        %1322 = vmatprep.subr.bf16.mxu0 0
        %1323 = vmatpush1.bf16.msra.mxu0 0
        %1324 = vmatprep.subr.bf16.mxu0 0
        %1325 = vmatpush1.bf16.msra.mxu0 0
        %1326 = vmatprep.subr.bf16.mxu0 0
        %1327 = vmatpush1.bf16.msra.mxu0 0
        %1328 = vmatprep.mubr.bf16.mxu0 0
        %1329 = vmatmul.mubr.bf16.gmra.mrb[0].mxu0 %v1290
        %v1330 = vpop.f32.mrb[0].mxu0
        %v1331 = vadd.f32 0.0, %v1330
        %v1332 = vpop.f32.mrb[0].mxu0
        %v1333 = vpop.f32.mrb[0].mxu0
        %v1334 = vpop.f32.mrb[0].mxu0
        %1335 = vdwg.mxu0
        %v1337 = vsel %vm1262, %v1286, 0
        %v1340 = vsel %vm1292, %v1288, 0
        %1342 = vmatprep.subr.bf16.mxu0 0
        %1343 = vmatpush1.bf16.msra.mxu0 %v1340
        %1344 = vmatprep.subr.bf16.mxu0 0
        %1345 = vmatpush1.bf16.msra.mxu0 0
        %1346 = vmatprep.subr.bf16.mxu0 0
        %1347 = vmatpush1.bf16.msra.mxu0 0
        %1348 = vmatprep.subr.bf16.mxu0 0
        %1349 = vmatpush1.bf16.msra.mxu0 0
        %1350 = vmatprep.subr.bf16.mxu0 0
        %1351 = vmatpush1.bf16.msra.mxu0 0
        %1352 = vmatprep.subr.bf16.mxu0 0
        %1353 = vmatpush1.bf16.msra.mxu0 0
        %1354 = vmatprep.subr.bf16.mxu0 0
        %1355 = vmatpush1.bf16.msra.mxu0 0
        %1356 = vmatprep.subr.bf16.mxu0 0
        %1357 = vmatpush1.bf16.msra.mxu0 0
        %1358 = vmatprep.subr.bf16.mxu0 0
        %1359 = vmatpush1.bf16.msra.mxu0 0
        %1360 = vmatprep.subr.bf16.mxu0 0
        %1361 = vmatpush1.bf16.msra.mxu0 0
        %1362 = vmatprep.subr.bf16.mxu0 0
        %1363 = vmatpush1.bf16.msra.mxu0 0
        %1364 = vmatprep.subr.bf16.mxu0 0
        %1365 = vmatpush1.bf16.msra.mxu0 0
        %1366 = vmatprep.subr.bf16.mxu0 0
        %1367 = vmatpush1.bf16.msra.mxu0 0
        %1368 = vmatprep.subr.bf16.mxu0 0
        %1369 = vmatpush1.bf16.msra.mxu0 0
        %1370 = vmatprep.subr.bf16.mxu0 0
        %1371 = vmatpush1.bf16.msra.mxu0 0
        %1372 = vmatprep.subr.bf16.mxu0 0
        %1373 = vmatpush1.bf16.msra.mxu0 0
        %1374 = vmatprep.mubr.bf16.mxu0 0
        %1375 = vmatmul.mubr.bf16.gmra.mrb[0].mxu0 %v1337
        %v1376 = vpop.f32.mrb[0].mxu0
        %v1377 = vadd.f32 0.0, %v1376
        %v1378 = vpop.f32.mrb[0].mxu0
        %v1379 = vpop.f32.mrb[0].mxu0
        %v1380 = vpop.f32.mrb[0].mxu0
        %1381 = vdwg.mxu0
        %v1382 = vpack.c.bf16 %v1377, %v1331
        %v1383 = vld [vmem:[%s833] sm:$0xf]
        %v1384 = vld [vmem:[%s833 + $0x4] sm:$0xf]
        %s1385 = scalar_lea.vmem %s806, 16
        %v1386 = vld [vmem:[%s1385] sm:$0xf]
        %v1387 = vld [vmem:[%s1385 + $0x4] sm:$0xf]
        %v1388 = vld [vmem:[%s1385 + $0x8] sm:$0xf]
        %v1389 = vld [vmem:[%s1385 + $0xc] sm:$0xf]
        %s1390 = scalar_lea.vmem %s810, 1
        %v1391 = vld [vmem:[%s1390] sm:$0x1]
        %v1393 = vlaneseq
        %v1394 = vshrl.u32 %v1393, 7
        %v1395 = vsub.s32 0, %v1394
        %v1396 = vrot.slane %v1391, %v1395
        %v1402 = vunpack.c.l.b16 %v1386
        %v1403 = vunpack.c.l.b16 %v1387
        %v1404 = vunpack.c.l.b16 %v1388
        %v1405 = vunpack.c.l.b16 %v1389
        %v1406 = vpack.c.b16 %v1403, %v1402
        %v1407 = vpack.c.b16 %v1405, %v1404
        %1410 = vmatprep.subr.bf16.mxu0 0
        %1411 = vmatpush1.bf16.msra.mxu0 %v1406
        %1412 = vmatprep.subr.bf16.mxu0 0
        %1413 = vmatpush1.bf16.msra.mxu0 %v1407
        %1414 = vmatprep.subr.bf16.mxu0 0
        %1415 = vmatpush1.bf16.msra.mxu0 0
        %1416 = vmatprep.subr.bf16.mxu0 0
        %1417 = vmatpush1.bf16.msra.mxu0 0
        %1418 = vmatprep.subr.bf16.mxu0 0
        %1419 = vmatpush1.bf16.msra.mxu0 0
        %1420 = vmatprep.subr.bf16.mxu0 0
        %1421 = vmatpush1.bf16.msra.mxu0 0
        %1422 = vmatprep.subr.bf16.mxu0 0
        %1423 = vmatpush1.bf16.msra.mxu0 0
        %1424 = vmatprep.subr.bf16.mxu0 0
        %1425 = vmatpush1.bf16.msra.mxu0 0
        %1426 = vmatprep.subr.bf16.mxu0 0
        %1427 = vmatpush1.bf16.msra.mxu0 0
        %1428 = vmatprep.subr.bf16.mxu0 0
        %1429 = vmatpush1.bf16.msra.mxu0 0
        %1430 = vmatprep.subr.bf16.mxu0 0
        %1431 = vmatpush1.bf16.msra.mxu0 0
        %1432 = vmatprep.subr.bf16.mxu0 0
        %1433 = vmatpush1.bf16.msra.mxu0 0
        %1434 = vmatprep.subr.bf16.mxu0 0
        %1435 = vmatpush1.bf16.msra.mxu0 0
        %1436 = vmatprep.subr.bf16.mxu0 0
        %1437 = vmatpush1.bf16.msra.mxu0 0
        %1438 = vmatprep.subr.bf16.mxu0 0
        %1439 = vmatpush1.bf16.msra.mxu0 0
        %1440 = vmatprep.subr.bf16.mxu0 0
        %1441 = vmatpush1.bf16.msra.mxu0 0
        %1442 = vmatprep.mubr.bf16.mxu0 0
        %1443 = vmatmul.mubr.bf16.gmra.mrb[0].mxu0 %v980
        %v1444 = vpop.f32.mrb[0].mxu0
        %v1445 = vadd.f32 %v1396, %v1444
        %v1446 = vpop.f32.mrb[0].mxu0
        %v1447 = vpop.f32.mrb[0].mxu0
        %v1448 = vadd.f32 %v1396, %v1447
        %v1449 = vpop.f32.mrb[0].mxu0
        %1450 = vdwg.mxu0
        %s1451 = scalar_lea.vmem %s815, 16
        %v1452 = vld [vmem:[%s1451] sm:$0xf]
        %v1453 = vld [vmem:[%s1451 + $0x4] sm:$0xf]
        %v1454 = vld [vmem:[%s1451 + $0x8] sm:$0xf]
        %v1455 = vld [vmem:[%s1451 + $0xc] sm:$0xf]
        %s1456 = scalar_lea.vmem %s819, 1
        %v1457 = vld [vmem:[%s1456] sm:$0x1]
        %v1459 = vlaneseq
        %v1460 = vshrl.u32 %v1459, 7
        %v1461 = vsub.s32 0, %v1460
        %v1462 = vrot.slane %v1457, %v1461
        %v1468 = vunpack.c.l.b16 %v1452
        %v1469 = vunpack.c.l.b16 %v1453
        %v1470 = vunpack.c.l.b16 %v1454
        %v1471 = vunpack.c.l.b16 %v1455
        %v1472 = vpack.c.b16 %v1469, %v1468
        %v1473 = vpack.c.b16 %v1471, %v1470
        %1476 = vmatprep.subr.bf16.mxu0 0
        %1477 = vmatpush1.bf16.msra.mxu0 %v1472
        %1478 = vmatprep.subr.bf16.mxu0 0
        %1479 = vmatpush1.bf16.msra.mxu0 %v1473
        %1480 = vmatprep.subr.bf16.mxu0 0
        %1481 = vmatpush1.bf16.msra.mxu0 0
        %1482 = vmatprep.subr.bf16.mxu0 0
        %1483 = vmatpush1.bf16.msra.mxu0 0
        %1484 = vmatprep.subr.bf16.mxu0 0
        %1485 = vmatpush1.bf16.msra.mxu0 0
        %1486 = vmatprep.subr.bf16.mxu0 0
        %1487 = vmatpush1.bf16.msra.mxu0 0
        %1488 = vmatprep.subr.bf16.mxu0 0
        %1489 = vmatpush1.bf16.msra.mxu0 0
        %1490 = vmatprep.subr.bf16.mxu0 0
        %1491 = vmatpush1.bf16.msra.mxu0 0
        %1492 = vmatprep.subr.bf16.mxu0 0
        %1493 = vmatpush1.bf16.msra.mxu0 0
        %1494 = vmatprep.subr.bf16.mxu0 0
        %1495 = vmatpush1.bf16.msra.mxu0 0
        %1496 = vmatprep.subr.bf16.mxu0 0
        %1497 = vmatpush1.bf16.msra.mxu0 0
        %1498 = vmatprep.subr.bf16.mxu0 0
        %1499 = vmatpush1.bf16.msra.mxu0 0
        %1500 = vmatprep.subr.bf16.mxu0 0
        %1501 = vmatpush1.bf16.msra.mxu0 0
        %1502 = vmatprep.subr.bf16.mxu0 0
        %1503 = vmatpush1.bf16.msra.mxu0 0
        %1504 = vmatprep.subr.bf16.mxu0 0
        %1505 = vmatpush1.bf16.msra.mxu0 0
        %1506 = vmatprep.subr.bf16.mxu0 0
        %1507 = vmatpush1.bf16.msra.mxu0 0
        %1508 = vmatprep.mubr.bf16.mxu0 0
        %1509 = vmatmul.mubr.bf16.gmra.mrb[0].mxu0 %v980
        %v1510 = vpop.f32.mrb[0].mxu0
        %v1511 = vadd.f32 %v1462, %v1510
        %v1512 = vpop.f32.mrb[0].mxu0
        %v1513 = vpop.f32.mrb[0].mxu0
        %v1514 = vadd.f32 %v1462, %v1513
        %v1515 = vpop.f32.mrb[0].mxu0
        %1516 = vdwg.mxu0
        %s1517 = scalar_lea.vmem %s824, 16
        %v1518 = vld [vmem:[%s1517] sm:$0xf]
        %v1519 = vld [vmem:[%s1517 + $0x4] sm:$0xf]
        %v1520 = vld [vmem:[%s1517 + $0x8] sm:$0xf]
        %v1521 = vld [vmem:[%s1517 + $0xc] sm:$0xf]
        %s1522 = scalar_lea.vmem %s828, 1
        %v1523 = vld [vmem:[%s1522] sm:$0x1]
        %v1525 = vlaneseq
        %v1526 = vshrl.u32 %v1525, 7
        %v1527 = vsub.s32 0, %v1526
        %v1528 = vrot.slane %v1523, %v1527
        %v1534 = vunpack.c.l.b16 %v1518
        %v1535 = vunpack.c.l.b16 %v1519
        %v1536 = vunpack.c.l.b16 %v1520
        %v1537 = vunpack.c.l.b16 %v1521
        %v1538 = vpack.c.b16 %v1535, %v1534
        %v1539 = vpack.c.b16 %v1537, %v1536
        %1542 = vmatprep.subr.bf16.mxu0 0
        %1543 = vmatpush1.bf16.msra.mxu0 %v1538
        %1544 = vmatprep.subr.bf16.mxu0 0
        %1545 = vmatpush1.bf16.msra.mxu0 %v1539
        %1546 = vmatprep.subr.bf16.mxu0 0
        %1547 = vmatpush1.bf16.msra.mxu0 0
        %1548 = vmatprep.subr.bf16.mxu0 0
        %1549 = vmatpush1.bf16.msra.mxu0 0
        %1550 = vmatprep.subr.bf16.mxu0 0
        %1551 = vmatpush1.bf16.msra.mxu0 0
        %1552 = vmatprep.subr.bf16.mxu0 0
        %1553 = vmatpush1.bf16.msra.mxu0 0
        %1554 = vmatprep.subr.bf16.mxu0 0
        %1555 = vmatpush1.bf16.msra.mxu0 0
        %1556 = vmatprep.subr.bf16.mxu0 0
        %1557 = vmatpush1.bf16.msra.mxu0 0
        %1558 = vmatprep.subr.bf16.mxu0 0
        %1559 = vmatpush1.bf16.msra.mxu0 0
        %1560 = vmatprep.subr.bf16.mxu0 0
        %1561 = vmatpush1.bf16.msra.mxu0 0
        %1562 = vmatprep.subr.bf16.mxu0 0
        %1563 = vmatpush1.bf16.msra.mxu0 0
        %1564 = vmatprep.subr.bf16.mxu0 0
        %1565 = vmatpush1.bf16.msra.mxu0 0
        %1566 = vmatprep.subr.bf16.mxu0 0
        %1567 = vmatpush1.bf16.msra.mxu0 0
        %1568 = vmatprep.subr.bf16.mxu0 0
        %1569 = vmatpush1.bf16.msra.mxu0 0
        %1570 = vmatprep.subr.bf16.mxu0 0
        %1571 = vmatpush1.bf16.msra.mxu0 0
        %1572 = vmatprep.subr.bf16.mxu0 0
        %1573 = vmatpush1.bf16.msra.mxu0 0
        %1574 = vmatprep.mubr.bf16.mxu0 0
        %1575 = vmatmul.mubr.bf16.gmra.mrb[0].mxu0 %v980
        %v1576 = vpop.f32.mrb[0].mxu0
        %v1577 = vadd.f32 %v1528, %v1576
        %v1578 = vpop.f32.mrb[0].mxu0
        %v1579 = vpop.f32.mrb[0].mxu0
        %v1580 = vadd.f32 %v1528, %v1579
        %v1581 = vpop.f32.mrb[0].mxu0
        %1582 = vdwg.mxu0
        %v1583 = vpack.c.bf16 %v1445, %v1445
        %v1584 = vpack.c.bf16 %v1448, %v1448
        %v1585 = vpack.c.bf16 %v1511, %v1511
        %v1586 = vpack.c.bf16 %v1514, %v1514
        %v1588 = vsel %vm1155, %v1583, 0
        %v1591 = vsel %vm1155, %v1585, 0
        %1593 = vmatprep.subr.bf16.mxu0 0
        %1594 = vmatpush1.bf16.xpose.msra.mxu0 %v1591
        %1595 = vmatprep.subr.bf16.mxu0 0
        %1596 = vmatpush1.bf16.xpose.msra.mxu0 0
        %1597 = vmatprep.subr.bf16.mxu0 0
        %1598 = vmatpush1.bf16.xpose.msra.mxu0 0
        %1599 = vmatprep.subr.bf16.mxu0 0
        %1600 = vmatpush1.bf16.xpose.msra.mxu0 0
        %1601 = vmatprep.subr.bf16.mxu0 0
        %1602 = vmatpush1.bf16.xpose.msra.mxu0 0
        %1603 = vmatprep.subr.bf16.mxu0 0
        %1604 = vmatpush1.bf16.xpose.msra.mxu0 0
        %1605 = vmatprep.subr.bf16.mxu0 0
        %1606 = vmatpush1.bf16.xpose.msra.mxu0 0
        %1607 = vmatprep.subr.bf16.mxu0 0
        %1608 = vmatpush1.bf16.xpose.msra.mxu0 0
        %1609 = vmatprep.subr.bf16.mxu0 0
        %1610 = vmatpush1.bf16.xpose.msra.mxu0 0
        %1611 = vmatprep.subr.bf16.mxu0 0
        %1612 = vmatpush1.bf16.xpose.msra.mxu0 0
        %1613 = vmatprep.subr.bf16.mxu0 0
        %1614 = vmatpush1.bf16.xpose.msra.mxu0 0
        %1615 = vmatprep.subr.bf16.mxu0 0
        %1616 = vmatpush1.bf16.xpose.msra.mxu0 0
        %1617 = vmatprep.subr.bf16.mxu0 0
        %1618 = vmatpush1.bf16.xpose.msra.mxu0 0
        %1619 = vmatprep.subr.bf16.mxu0 0
        %1620 = vmatpush1.bf16.xpose.msra.mxu0 0
        %1621 = vmatprep.subr.bf16.mxu0 0
        %1622 = vmatpush1.bf16.xpose.msra.mxu0 0
        %1623 = vmatprep.subr.bf16.mxu0 0
        %1624 = vmatpush1.bf16.xpose.msra.mxu0 0
        %1625 = vmatprep.mubr.bf16.mxu0 0
        %1626 = vmatmul.mubr.bf16.gmra.mrb[0].mxu0 %v1588
        %v1627 = vpop.f32.mrb[0].mxu0
        %v1628 = vadd.f32 0.0, %v1627
        %v1629 = vpop.f32.mrb[0].mxu0
        %v1630 = vpop.f32.mrb[0].mxu0
        %v1631 = vpop.f32.mrb[0].mxu0
        %1632 = vdwg.mxu0
        %v1634 = vsel %vm1155, %v1584, 0
        %v1637 = vsel %vm1155, %v1586, 0
        %1639 = vmatprep.subr.bf16.mxu0 0
        %1640 = vmatpush1.bf16.xpose.msra.mxu0 %v1637
        %1641 = vmatprep.subr.bf16.mxu0 0
        %1642 = vmatpush1.bf16.xpose.msra.mxu0 0
        %1643 = vmatprep.subr.bf16.mxu0 0
        %1644 = vmatpush1.bf16.xpose.msra.mxu0 0
        %1645 = vmatprep.subr.bf16.mxu0 0
        %1646 = vmatpush1.bf16.xpose.msra.mxu0 0
        %1647 = vmatprep.subr.bf16.mxu0 0
        %1648 = vmatpush1.bf16.xpose.msra.mxu0 0
        %1649 = vmatprep.subr.bf16.mxu0 0
        %1650 = vmatpush1.bf16.xpose.msra.mxu0 0
        %1651 = vmatprep.subr.bf16.mxu0 0
        %1652 = vmatpush1.bf16.xpose.msra.mxu0 0
        %1653 = vmatprep.subr.bf16.mxu0 0
        %1654 = vmatpush1.bf16.xpose.msra.mxu0 0
        %1655 = vmatprep.subr.bf16.mxu0 0
        %1656 = vmatpush1.bf16.xpose.msra.mxu0 0
        %1657 = vmatprep.subr.bf16.mxu0 0
        %1658 = vmatpush1.bf16.xpose.msra.mxu0 0
        %1659 = vmatprep.subr.bf16.mxu0 0
        %1660 = vmatpush1.bf16.xpose.msra.mxu0 0
        %1661 = vmatprep.subr.bf16.mxu0 0
        %1662 = vmatpush1.bf16.xpose.msra.mxu0 0
        %1663 = vmatprep.subr.bf16.mxu0 0
        %1664 = vmatpush1.bf16.xpose.msra.mxu0 0
        %1665 = vmatprep.subr.bf16.mxu0 0
        %1666 = vmatpush1.bf16.xpose.msra.mxu0 0
        %1667 = vmatprep.subr.bf16.mxu0 0
        %1668 = vmatpush1.bf16.xpose.msra.mxu0 0
        %1669 = vmatprep.subr.bf16.mxu0 0
        %1670 = vmatpush1.bf16.xpose.msra.mxu0 0
        %1671 = vmatprep.mubr.bf16.mxu0 0
        %1672 = vmatmul.mubr.bf16.gmra.mrb[0].mxu0 %v1634
        %v1673 = vpop.f32.mrb[0].mxu0
        %v1674 = vadd.f32 0.0, %v1673
        %v1675 = vpop.f32.mrb[0].mxu0
        %v1676 = vpop.f32.mrb[0].mxu0
        %v1677 = vpop.f32.mrb[0].mxu0
        %1678 = vdwg.mxu0
        %v1679 = vmul.f32 %v1628, 0.25
        %v1680 = vmul.f32 %v1674, 0.25
        %v1681 = vadd.f32 %v1679, %v1253
        %v1682 = vadd.f32 %v1680, %v1257
        %v1683 = vsel %vm1262, %v1681, -inf
        %1684 = vmax.xlane.f32.xlu0 %v1683
        %v1685 = vpop.xlane.xlu0 %1684
        %v1686 = vsel %vm1262, %v1682, -inf
        %1687 = vmax.xlane.f32.xlu0 %v1686
        %v1688 = vpop.xlane.xlu0 %1687
        %v1689 = vsub.f32 %v1681, %v1685
        %v1690 = vsub.f32 %v1682, %v1688
        %v1691 = vmul.f32 %v1689, 1.442695
        %v1692 = vpow.pop %v1691
        %v1693 = vmul.f32 %v1690, 1.442695
        %v1694 = vpow.pop %v1693
        %v1695 = vsel %vm1262, %v1692, 0.0
        %1696 = vadd.xlane.f32.xlu0 %v1695
        %v1697 = vpop.xlane.xlu0 %1696
        %v1698 = vsel %vm1262, %v1694, 0.0
        %1699 = vadd.xlane.f32.xlu0 %v1698
        %v1700 = vpop.xlane.xlu0 %1699
        %v1701 = vrcp.pop %v1697
        %v1702 = vrcp.pop %v1700
        %v1703 = vmul.f32 %v1692, %v1701
        %v1704 = vmul.f32 %v1694, %v1702
        %v1705 = vpack.c.bf16 %v1703, %v1703
        %v1706 = vpack.c.bf16 %v1704, %v1704
        %v1707 = vpack.c.bf16 %v1577, %v1577
        %v1708 = vpack.c.bf16 %v1580, %v1580
        %v1710 = vsel %vm1262, %v1705, 0
        %v1713 = vsel %vm1292, %v1707, 0
        %1715 = vmatprep.subr.bf16.mxu0 0
        %1716 = vmatpush1.bf16.msra.mxu0 %v1713
        %1717 = vmatprep.subr.bf16.mxu0 0
        %1718 = vmatpush1.bf16.msra.mxu0 0
        %1719 = vmatprep.subr.bf16.mxu0 0
        %1720 = vmatpush1.bf16.msra.mxu0 0
        %1721 = vmatprep.subr.bf16.mxu0 0
        %1722 = vmatpush1.bf16.msra.mxu0 0
        %1723 = vmatprep.subr.bf16.mxu0 0
        %1724 = vmatpush1.bf16.msra.mxu0 0
        %1725 = vmatprep.subr.bf16.mxu0 0
        %1726 = vmatpush1.bf16.msra.mxu0 0
        %1727 = vmatprep.subr.bf16.mxu0 0
        %1728 = vmatpush1.bf16.msra.mxu0 0
        %1729 = vmatprep.subr.bf16.mxu0 0
        %1730 = vmatpush1.bf16.msra.mxu0 0
        %1731 = vmatprep.subr.bf16.mxu0 0
        %1732 = vmatpush1.bf16.msra.mxu0 0
        %1733 = vmatprep.subr.bf16.mxu0 0
        %1734 = vmatpush1.bf16.msra.mxu0 0
        %1735 = vmatprep.subr.bf16.mxu0 0
        %1736 = vmatpush1.bf16.msra.mxu0 0
        %1737 = vmatprep.subr.bf16.mxu0 0
        %1738 = vmatpush1.bf16.msra.mxu0 0
        %1739 = vmatprep.subr.bf16.mxu0 0
        %1740 = vmatpush1.bf16.msra.mxu0 0
        %1741 = vmatprep.subr.bf16.mxu0 0
        %1742 = vmatpush1.bf16.msra.mxu0 0
        %1743 = vmatprep.subr.bf16.mxu0 0
        %1744 = vmatpush1.bf16.msra.mxu0 0
        %1745 = vmatprep.subr.bf16.mxu0 0
        %1746 = vmatpush1.bf16.msra.mxu0 0
        %1747 = vmatprep.mubr.bf16.mxu0 0
        %1748 = vmatmul.mubr.bf16.gmra.mrb[0].mxu0 %v1710
        %v1749 = vpop.f32.mrb[0].mxu0
        %v1750 = vadd.f32 0.0, %v1749
        %v1751 = vpop.f32.mrb[0].mxu0
        %v1752 = vpop.f32.mrb[0].mxu0
        %v1753 = vpop.f32.mrb[0].mxu0
        %1754 = vdwg.mxu0
        %v1756 = vsel %vm1262, %v1706, 0
        %v1759 = vsel %vm1292, %v1708, 0
        %1761 = vmatprep.subr.bf16.mxu0 0
        %1762 = vmatpush1.bf16.msra.mxu0 %v1759
        %1763 = vmatprep.subr.bf16.mxu0 0
        %1764 = vmatpush1.bf16.msra.mxu0 0
        %1765 = vmatprep.subr.bf16.mxu0 0
        %1766 = vmatpush1.bf16.msra.mxu0 0
        %1767 = vmatprep.subr.bf16.mxu0 0
        %1768 = vmatpush1.bf16.msra.mxu0 0
        %1769 = vmatprep.subr.bf16.mxu0 0
        %1770 = vmatpush1.bf16.msra.mxu0 0
        %1771 = vmatprep.subr.bf16.mxu0 0
        %1772 = vmatpush1.bf16.msra.mxu0 0
        %1773 = vmatprep.subr.bf16.mxu0 0
        %1774 = vmatpush1.bf16.msra.mxu0 0
        %1775 = vmatprep.subr.bf16.mxu0 0
        %1776 = vmatpush1.bf16.msra.mxu0 0
        %1777 = vmatprep.subr.bf16.mxu0 0
        %1778 = vmatpush1.bf16.msra.mxu0 0
        %1779 = vmatprep.subr.bf16.mxu0 0
        %1780 = vmatpush1.bf16.msra.mxu0 0
        %1781 = vmatprep.subr.bf16.mxu0 0
        %1782 = vmatpush1.bf16.msra.mxu0 0
        %1783 = vmatprep.subr.bf16.mxu0 0
        %1784 = vmatpush1.bf16.msra.mxu0 0
        %1785 = vmatprep.subr.bf16.mxu0 0
        %1786 = vmatpush1.bf16.msra.mxu0 0
        %1787 = vmatprep.subr.bf16.mxu0 0
        %1788 = vmatpush1.bf16.msra.mxu0 0
        %1789 = vmatprep.subr.bf16.mxu0 0
        %1790 = vmatpush1.bf16.msra.mxu0 0
        %1791 = vmatprep.subr.bf16.mxu0 0
        %1792 = vmatpush1.bf16.msra.mxu0 0
        %1793 = vmatprep.mubr.bf16.mxu0 0
        %1794 = vmatmul.mubr.bf16.gmra.mrb[0].mxu0 %v1756
        %v1795 = vpop.f32.mrb[0].mxu0
        %v1796 = vadd.f32 0.0, %v1795
        %v1797 = vpop.f32.mrb[0].mxu0
        %v1798 = vpop.f32.mrb[0].mxu0
        %v1799 = vpop.f32.mrb[0].mxu0
        %1800 = vdwg.mxu0
        %v1801 = vpack.c.bf16 %v1796, %v1750
        %s1802 = scalar_lea.vmem %s833, 8
        %v1803 = vld [vmem:[%s1802] sm:$0xf]
        %v1804 = vld [vmem:[%s1802 + $0x4] sm:$0xf]
        %v1807 = vunpack.c.l.b16 %v1803
        %v1808 = vunpack.c.l.b16 %v1804
        %v1809 = vpack.c.b16 %v1808, %v1807
        %v1812 = vsel %vm1155, %v1801, 0
        %1814 = vmatprep.subr.bf16.mxu0 0
        %1815 = vmatpush1.bf16.msra.mxu0 %v1809
        %1816 = vmatprep.subr.bf16.mxu0 0
        %1817 = vmatpush1.bf16.msra.mxu0 0
        %1818 = vmatprep.subr.bf16.mxu0 0
        %1819 = vmatpush1.bf16.msra.mxu0 0
        %1820 = vmatprep.subr.bf16.mxu0 0
        %1821 = vmatpush1.bf16.msra.mxu0 0
        %1822 = vmatprep.subr.bf16.mxu0 0
        %1823 = vmatpush1.bf16.msra.mxu0 0
        %1824 = vmatprep.subr.bf16.mxu0 0
        %1825 = vmatpush1.bf16.msra.mxu0 0
        %1826 = vmatprep.subr.bf16.mxu0 0
        %1827 = vmatpush1.bf16.msra.mxu0 0
        %1828 = vmatprep.subr.bf16.mxu0 0
        %1829 = vmatpush1.bf16.msra.mxu0 0
        %1830 = vmatprep.subr.bf16.mxu0 0
        %1831 = vmatpush1.bf16.msra.mxu0 0
        %1832 = vmatprep.subr.bf16.mxu0 0
        %1833 = vmatpush1.bf16.msra.mxu0 0
        %1834 = vmatprep.subr.bf16.mxu0 0
        %1835 = vmatpush1.bf16.msra.mxu0 0
        %1836 = vmatprep.subr.bf16.mxu0 0
        %1837 = vmatpush1.bf16.msra.mxu0 0
        %1838 = vmatprep.subr.bf16.mxu0 0
        %1839 = vmatpush1.bf16.msra.mxu0 0
        %1840 = vmatprep.subr.bf16.mxu0 0
        %1841 = vmatpush1.bf16.msra.mxu0 0
        %1842 = vmatprep.subr.bf16.mxu0 0
        %1843 = vmatpush1.bf16.msra.mxu0 0
        %1844 = vmatprep.subr.bf16.mxu0 0
        %1845 = vmatpush1.bf16.msra.mxu0 0
        %1846 = vmatprep.mubr.bf16.mxu0 0
        %1847 = vmatmul.mubr.bf16.gmra.mrb[0].mxu0 %v1812
        %v1848 = vpop.f32.mrb[0].mxu0
        %v1849 = vadd.f32 0.0, %v1848
        %v1850 = vpop.f32.mrb[0].mxu0
        %v1851 = vpop.f32.mrb[0].mxu0
        %v1852 = vadd.f32 0.0, %v1851
        %v1853 = vpop.f32.mrb[0].mxu0
        %1854 = vdwg.mxu0
        %v1857 = vunpack.c.l.b16 %v1383
        %v1858 = vunpack.c.l.b16 %v1384
        %v1859 = vpack.c.b16 %v1858, %v1857
        %v1862 = vsel %vm1155, %v1382, 0
        %1864 = vmatprep.subr.bf16.mxu0 0
        %1865 = vmatpush1.bf16.msra.mxu0 %v1859
        %1866 = vmatprep.subr.bf16.mxu0 0
        %1867 = vmatpush1.bf16.msra.mxu0 0
        %1868 = vmatprep.subr.bf16.mxu0 0
        %1869 = vmatpush1.bf16.msra.mxu0 0
        %1870 = vmatprep.subr.bf16.mxu0 0
        %1871 = vmatpush1.bf16.msra.mxu0 0
        %1872 = vmatprep.subr.bf16.mxu0 0
        %1873 = vmatpush1.bf16.msra.mxu0 0
        %1874 = vmatprep.subr.bf16.mxu0 0
        %1875 = vmatpush1.bf16.msra.mxu0 0
        %1876 = vmatprep.subr.bf16.mxu0 0
        %1877 = vmatpush1.bf16.msra.mxu0 0
        %1878 = vmatprep.subr.bf16.mxu0 0
        %1879 = vmatpush1.bf16.msra.mxu0 0
        %1880 = vmatprep.subr.bf16.mxu0 0
        %1881 = vmatpush1.bf16.msra.mxu0 0
        %1882 = vmatprep.subr.bf16.mxu0 0
        %1883 = vmatpush1.bf16.msra.mxu0 0
        %1884 = vmatprep.subr.bf16.mxu0 0
        %1885 = vmatpush1.bf16.msra.mxu0 0
        %1886 = vmatprep.subr.bf16.mxu0 0
        %1887 = vmatpush1.bf16.msra.mxu0 0
        %1888 = vmatprep.subr.bf16.mxu0 0
        %1889 = vmatpush1.bf16.msra.mxu0 0
        %1890 = vmatprep.subr.bf16.mxu0 0
        %1891 = vmatpush1.bf16.msra.mxu0 0
        %1892 = vmatprep.subr.bf16.mxu0 0
        %1893 = vmatpush1.bf16.msra.mxu0 0
        %1894 = vmatprep.subr.bf16.mxu0 0
        %1895 = vmatpush1.bf16.msra.mxu0 0
        %1896 = vmatprep.mubr.bf16.mxu0 0
        %1897 = vmatmul.mubr.bf16.gmra.mrb[0].mxu0 %v1862
        %v1898 = vpop.f32.mrb[0].mxu0
        %v1899 = vadd.f32 %v1849, %v1898
        %v1900 = vpop.f32.mrb[0].mxu0
        %v1901 = vpop.f32.mrb[0].mxu0
        %v1902 = vadd.f32 %v1852, %v1901
        %v1903 = vpop.f32.mrb[0].mxu0
        %1904 = vdwg.mxu0
        %v1905 = vld [vmem:[%s836] sm:$0x1]
        %v1907 = vlaneseq
        %v1908 = vshrl.u32 %v1907, 7
        %v1909 = vsub.s32 0, %v1908
        %v1910 = vrot.slane %v1905, %v1909
        %v1912 = vadd.f32 %v1899, %v1910
        %v1913 = vadd.f32 %v1902, %v1910
        %v1914 = vadd.f32 %v946, %v1912
        %v1915 = vadd.f32 %v947, %v1913
        %v1916 = vld [vmem:[%s839] sm:$0x1]
        %v1917 = vld [vmem:[%s842] sm:$0x1]
        %v1918 = vsel %vm978, %v1914, 0.0
        %1919 = vadd.xlane.f32.xlu0 %v1918
        %v1920 = vpop.xlane.xlu0 %1919
        %v1921 = vsel %vm978, %v1915, 0.0
        %1922 = vadd.xlane.f32.xlu0 %v1921
        %v1923 = vpop.xlane.xlu0 %1922
        %v1924 = vrcp.pop 32.0
        %v1925 = vmul.f32 %v1920, %v1924
        %v1926 = vmul.f32 %v1923, %v1924
        %v1927 = vsub.f32 %v1914, %v1925
        %v1928 = vsub.f32 %v1915, %v1926
        %v1929 = vmul.f32 %v1927, %v1927
        %v1930 = vmul.f32 %v1928, %v1928
        %v1931 = vsel %vm978, %v1929, 0.0
        %1932 = vadd.xlane.f32.xlu0 %v1931
        %v1933 = vpop.xlane.xlu0 %1932
        %v1934 = vsel %vm978, %v1930, 0.0
        %1935 = vadd.xlane.f32.xlu0 %v1934
        %v1936 = vpop.xlane.xlu0 %1935
        %v1937 = vmul.f32 %v1933, %v1924
        %v1938 = vmul.f32 %v1936, %v1924
        %v1939 = vadd.f32 %v1937, 1e-12
        %v1940 = vadd.f32 %v1938, 1e-12
        %v1941 = vrsqrt.pop %v1939
        %v1942 = vrsqrt.pop %v1940
        %v1943 = vmul.f32 %v1927, %v1941
        %v1944 = vmul.f32 %v1928, %v1942
        %v1946 = vlaneseq
        %v1947 = vshrl.u32 %v1946, 7
        %v1948 = vsub.s32 0, %v1947
        %v1949 = vrot.slane %v1916, %v1948
        %v1951 = vmul.f32 %v1943, %v1949
        %v1952 = vmul.f32 %v1944, %v1949
        %v1954 = vlaneseq
        %v1955 = vshrl.u32 %v1954, 7
        %v1956 = vsub.s32 0, %v1955
        %v1957 = vrot.slane %v1917, %v1956
        %v1959 = vadd.f32 %v1951, %v1957
        %v1960 = vadd.f32 %v1952, %v1957
        %v1961 = vpack.c.bf16 %v1960, %v1959
        %v1962 = vld [vmem:[%s847] sm:$0xf]
        %v1963 = vld [vmem:[%s847 + $0x4] sm:$0xf]
        %v1964 = vld [vmem:[%s847 + $0x8] sm:$0xf]
        %v1965 = vld [vmem:[%s847 + $0xc] sm:$0xf]
        %v1966 = vld [vmem:[%s850] sm:$0x1]
        %v1968 = vlaneseq
        %v1969 = vshrl.u32 %v1968, 7
        %v1970 = vsub.s32 0, %v1969
        %v1971 = vrot.slane %v1966, %v1970
        %v1977 = vunpack.c.l.b16 %v1962
        %v1978 = vunpack.c.l.b16 %v1963
        %v1979 = vunpack.c.l.b16 %v1964
        %v1980 = vunpack.c.l.b16 %v1965
        %v1981 = vpack.c.b16 %v1978, %v1977
        %v1982 = vpack.c.b16 %v1980, %v1979
        %v1986 = vsel %vm978, %v1961, 0
        %1988 = vmatprep.subr.bf16.mxu0 0
        %1989 = vmatpush1.bf16.msra.mxu0 %v1981
        %1990 = vmatprep.subr.bf16.mxu0 0
        %1991 = vmatpush1.bf16.msra.mxu0 %v1982
        %1992 = vmatprep.subr.bf16.mxu0 0
        %1993 = vmatpush1.bf16.msra.mxu0 0
        %1994 = vmatprep.subr.bf16.mxu0 0
        %1995 = vmatpush1.bf16.msra.mxu0 0
        %1996 = vmatprep.subr.bf16.mxu0 0
        %1997 = vmatpush1.bf16.msra.mxu0 0
        %1998 = vmatprep.subr.bf16.mxu0 0
        %1999 = vmatpush1.bf16.msra.mxu0 0
        %2000 = vmatprep.subr.bf16.mxu0 0
        %2001 = vmatpush1.bf16.msra.mxu0 0
        %2002 = vmatprep.subr.bf16.mxu0 0
        %2003 = vmatpush1.bf16.msra.mxu0 0
        %2004 = vmatprep.subr.bf16.mxu0 0
        %2005 = vmatpush1.bf16.msra.mxu0 0
        %2006 = vmatprep.subr.bf16.mxu0 0
        %2007 = vmatpush1.bf16.msra.mxu0 0
        %2008 = vmatprep.subr.bf16.mxu0 0
        %2009 = vmatpush1.bf16.msra.mxu0 0
        %2010 = vmatprep.subr.bf16.mxu0 0
        %2011 = vmatpush1.bf16.msra.mxu0 0
        %2012 = vmatprep.subr.bf16.mxu0 0
        %2013 = vmatpush1.bf16.msra.mxu0 0
        %2014 = vmatprep.subr.bf16.mxu0 0
        %2015 = vmatpush1.bf16.msra.mxu0 0
        %2016 = vmatprep.subr.bf16.mxu0 0
        %2017 = vmatpush1.bf16.msra.mxu0 0
        %2018 = vmatprep.subr.bf16.mxu0 0
        %2019 = vmatpush1.bf16.msra.mxu0 0
        %2020 = vmatprep.mubr.bf16.mxu0 0
        %2021 = vmatmul.mubr.bf16.gmra.mrb[0].mxu0 %v1986
        %v2022 = vpop.f32.mrb[0].mxu0
        %v2023 = vadd.f32 %v1971, %v2022
        %v2024 = vpop.f32.mrb[0].mxu0
        %v2025 = vpop.f32.mrb[0].mxu0
        %v2026 = vadd.f32 %v1971, %v2025
        %v2027 = vpop.f32.mrb[0].mxu0
        %2028 = vdwg.mxu0
        %v2029 = vmul.f32 %v2023, %v2023
        %v2030 = vmul.f32 %v2026, %v2026
        %v2031 = vmul.f32 %v2023, %v2029
        %v2032 = vmul.f32 %v2026, %v2030
        %v2033 = vmul.f32 %v2031, 0.044715
        %v2034 = vmul.f32 %v2032, 0.044715
        %v2035 = vadd.f32 %v2023, %v2033
        %v2036 = vadd.f32 %v2026, %v2034
        %v2037 = vmul.f32 %v2035, 0.7978846
        %v2038 = vmul.f32 %v2036, 0.7978846
        %v2039 = vtanh.pop %v2037
        %v2040 = vtanh.pop %v2038
        %v2041 = vadd.f32 %v2039, 1.0
        %v2042 = vadd.f32 %v2040, 1.0
        %v2043 = vmul.f32 %v2041, 0.5
        %v2044 = vmul.f32 %v2042, 0.5
        %v2045 = vmul.f32 %v2023, %v2043
        %v2046 = vmul.f32 %v2026, %v2044
        %v2047 = vpack.c.bf16 %v2046, %v2045
        %v2048 = vld [vmem:[%s855] sm:$0xf]
        %v2049 = vld [vmem:[%s855 + $0x4] sm:$0xf]
        %v2050 = vld [vmem:[%s855 + $0x8] sm:$0xf]
        %v2051 = vld [vmem:[%s855 + $0xc] sm:$0xf]
        %v2052 = vld [vmem:[%s855 + $0x10] sm:$0xf]
        %v2053 = vld [vmem:[%s855 + $0x14] sm:$0xf]
        %v2054 = vld [vmem:[%s855 + $0x18] sm:$0xf]
        %v2055 = vld [vmem:[%s855 + $0x1c] sm:$0xf]
        %v2056 = vld [vmem:[%s858] sm:$0x1]
        %v2058 = vlaneseq
        %v2059 = vshrl.u32 %v2058, 7
        %v2060 = vsub.s32 0, %v2059
        %v2061 = vrot.slane %v2056, %v2060
        %v2071 = vunpack.c.l.b16 %v2048
        %v2072 = vunpack.c.l.b16 %v2049
        %v2073 = vunpack.c.l.b16 %v2050
        %v2074 = vunpack.c.l.b16 %v2051
        %v2075 = vunpack.c.l.b16 %v2052
        %v2076 = vunpack.c.l.b16 %v2053
        %v2077 = vunpack.c.l.b16 %v2054
        %v2078 = vunpack.c.l.b16 %v2055
        %v2079 = vpack.c.b16 %v2072, %v2071
        %v2080 = vpack.c.b16 %v2074, %v2073
        %v2081 = vpack.c.b16 %v2076, %v2075
        %v2082 = vpack.c.b16 %v2078, %v2077
        %vm2087 = vcmask 523264
        %v2089 = vsel %vm2087, %v2047, 0
        %2091 = vmatprep.subr.bf16.mxu0 0
        %2092 = vmatpush1.bf16.msra.mxu0 %v2079
        %2093 = vmatprep.subr.bf16.mxu0 0
        %2094 = vmatpush1.bf16.msra.mxu0 %v2080
        %2095 = vmatprep.subr.bf16.mxu0 0
        %2096 = vmatpush1.bf16.msra.mxu0 %v2081
        %2097 = vmatprep.subr.bf16.mxu0 0
        %2098 = vmatpush1.bf16.msra.mxu0 %v2082
        %2099 = vmatprep.subr.bf16.mxu0 0
        %2100 = vmatpush1.bf16.msra.mxu0 0
        %2101 = vmatprep.subr.bf16.mxu0 0
        %2102 = vmatpush1.bf16.msra.mxu0 0
        %2103 = vmatprep.subr.bf16.mxu0 0
        %2104 = vmatpush1.bf16.msra.mxu0 0
        %2105 = vmatprep.subr.bf16.mxu0 0
        %2106 = vmatpush1.bf16.msra.mxu0 0
        %2107 = vmatprep.subr.bf16.mxu0 0
        %2108 = vmatpush1.bf16.msra.mxu0 0
        %2109 = vmatprep.subr.bf16.mxu0 0
        %2110 = vmatpush1.bf16.msra.mxu0 0
        %2111 = vmatprep.subr.bf16.mxu0 0
        %2112 = vmatpush1.bf16.msra.mxu0 0
        %2113 = vmatprep.subr.bf16.mxu0 0
        %2114 = vmatpush1.bf16.msra.mxu0 0
        %2115 = vmatprep.subr.bf16.mxu0 0
        %2116 = vmatpush1.bf16.msra.mxu0 0
        %2117 = vmatprep.subr.bf16.mxu0 0
        %2118 = vmatpush1.bf16.msra.mxu0 0
        %2119 = vmatprep.subr.bf16.mxu0 0
        %2120 = vmatpush1.bf16.msra.mxu0 0
        %2121 = vmatprep.subr.bf16.mxu0 0
        %2122 = vmatpush1.bf16.msra.mxu0 0
        %2123 = vmatprep.mubr.bf16.mxu0 0
        %2124 = vmatmul.mubr.bf16.gmra.mrb[0].mxu0 %v2089
        %v2125 = vpop.f32.mrb[0].mxu0
        %v2126 = vadd.f32 %v2061, %v2125
        %v2127 = vpop.f32.mrb[0].mxu0
        %v2128 = vpop.f32.mrb[0].mxu0
        %v2129 = vadd.f32 %v2061, %v2128
        %v2130 = vpop.f32.mrb[0].mxu0
        %2131 = vdwg.mxu0
        %v2132 = vadd.f32 %v1959, %v2126
        %v2133 = vadd.f32 %v1960, %v2129
        %v2134 = vld [vmem:[%s861] sm:$0x1]
        %v2135 = vld [vmem:[%s864] sm:$0x1]
        %v2136 = vsel %vm978, %v2132, 0.0
        %2137 = vadd.xlane.f32.xlu0 %v2136
        %v2138 = vpop.xlane.xlu0 %2137
        %v2139 = vsel %vm978, %v2133, 0.0
        %2140 = vadd.xlane.f32.xlu0 %v2139
        %v2141 = vpop.xlane.xlu0 %2140
        %v2142 = vmul.f32 %v2138, %v1924
        %v2143 = vmul.f32 %v2141, %v1924
        %v2144 = vsub.f32 %v2132, %v2142
        %v2145 = vsub.f32 %v2133, %v2143
        %v2146 = vmul.f32 %v2144, %v2144
        %v2147 = vmul.f32 %v2145, %v2145
        %v2148 = vsel %vm978, %v2146, 0.0
        %2149 = vadd.xlane.f32.xlu0 %v2148
        %v2150 = vpop.xlane.xlu0 %2149
        %v2151 = vsel %vm978, %v2147, 0.0
        %2152 = vadd.xlane.f32.xlu0 %v2151
        %v2153 = vpop.xlane.xlu0 %2152
        %v2154 = vmul.f32 %v2150, %v1924
        %v2155 = vmul.f32 %v2153, %v1924
        %v2156 = vadd.f32 %v2154, 1e-12
        %v2157 = vadd.f32 %v2155, 1e-12
        %v2158 = vrsqrt.pop %v2156
        %v2159 = vrsqrt.pop %v2157
        %v2160 = vmul.f32 %v2144, %v2158
        %v2161 = vmul.f32 %v2145, %v2159
        %v2163 = vlaneseq
        %v2164 = vshrl.u32 %v2163, 7
        %v2165 = vsub.s32 0, %v2164
        %v2166 = vrot.slane %v2134, %v2165
        %v2168 = vmul.f32 %v2160, %v2166
        %v2169 = vmul.f32 %v2161, %v2166
        %v2171 = vlaneseq
        %v2172 = vshrl.u32 %v2171, 7
        %v2173 = vsub.s32 0, %v2172
        %v2174 = vrot.slane %v2135, %v2173
        %v2176 = vadd.f32 %v2168, %v2174
        %v2177 = vadd.f32 %v2169, %v2174
        %2178 = vst.msk [vmem:[#allocation2] sm:$0xff] %vm978, %v2176
        %2179 = vst.msk [vmem:[#allocation2 + $0x8] sm:$0xff] %vm978, %v2177
        %p2180 = scmp.eq.s32.totalorder %s32, 1
        // Predicated region
        $region105: #{tpu_custom_call.1} parent=99 // pred_check
          %p2181 = pneg %p2180
        $region106: #{tpu_custom_call.1} parent=99 // pred_check_branch
          %2183 = sbr.rel (%p2181) target = $region108
        $region107: #{tpu_custom_call.1} parent=99 // pred_region
          %v2184 = vlaneseq
          %v2185 = vshrl.u32 %v2184, 7
          %v2186 = vsub.s32 0, %v2185
          %v2187 = vrot.slane %v920, %v2186
          %2189 = vbcast.lane.b32.xlu0 %v2187, 256
          %v2190 = vpop.permute.xlu0 %2189
          %v2191 = vlaneseq
          %v2192 = vshrl.u32 %v2191, 7
          %v2193 = vsub.s32 1, %v2192
          %v2194 = vrot.slane %v920, %v2193
          %2196 = vbcast.lane.b32.xlu0 %v2194, 256
          %v2197 = vpop.permute.xlu0 %2196
          %v2198 = vmul.f32 %v2176, %v2190
          %v2199 = vmul.f32 %v2177, %v2197
          %v2200 = vsel %vm978, %v2198, 0.0
          %v2201 = vrot.slane %v2200, 4
          %v2202 = vadd.f32 %v2200, %v2201
          %v2203 = vrot.slane %v2202, 2
          %v2204 = vadd.f32 %v2202, %v2203
          %v2205 = vrot.slane %v2204, 1
          %v2206 = vadd.f32 %v2204, %v2205
          %v2207 = vsel %vm978, %v2199, 0.0
          %v2208 = vrot.slane %v2207, 4
          %v2209 = vadd.f32 %v2207, %v2208
          %v2210 = vrot.slane %v2209, 2
          %v2211 = vadd.f32 %v2209, %v2210
          %v2212 = vrot.slane %v2211, 1
          %v2213 = vadd.f32 %v2211, %v2212
          %vm2214 = vcmask 58368
          %v2215 = vsel %vm2214, %v920, 0.0
          %2216 = vadd.xlane.f32.xlu0 %v2215
          %v2217 = vpop.xlane.xlu0 %2216
          %v2218 = vmax.f32 %v2217, 1e-09
          %v2219 = vrcp.pop %v2218
          %v2221 = vrot.slane %v2219, 1
          %v2224 = vmul.f32 %v2206, %v2219
          %v2225 = vmul.f32 %v2213, %v2221
          %v2228 = vrot.slane %v2225, 7
          %vm2229 = vcmask 1041409
          %v2230 = vsel %vm2229, %v2228, %v2224
          %vm2232 = vcmask 254976
          %2233 = vst.msk [vmem:[#allocation3] sm:$0x3] %vm2232, %v2230
        $region108: #{tpu_custom_call.1} parent=99 // pred_fallthru
          _
        // Predicated region
        $region109: #{tpu_custom_call.1} parent=99 // pred_check
          %p2234 = pneg %p545
        $region110: #{tpu_custom_call.1} parent=99 // pred_check_branch
          %2236 = sbr.rel (%p2234) target = $region112
        $region111: #{tpu_custom_call.1} parent=99 // pred_region
          %s2238 = ssub.s32 32, 32
          %2239 = vsyncadd [#allocation4], %s2238
          %s2241 = sshll.u32 [#allocation3], 4
          %s2242 = int_to_ptr.vmem [resolvable:$true] %s2241
          %2244 = dma.vmem_to_hbm [thread:$0]  %s2242, 32, %s20, [#allocation4]
        $region112: #{tpu_custom_call.1} parent=99 // pred_fallthru
          _
        // Predicated region
        $region113: #{tpu_custom_call.1} parent=99 // pred_check
          %p2245 = pneg %p545
        $region114: #{tpu_custom_call.1} parent=99 // pred_check_branch
          %2247 = sbr.rel (%p2245) target = $region116
        $region115: #{tpu_custom_call.1} parent=99 // pred_region
          %2248 = dma.done [#allocation4], 32
        $region116: #{tpu_custom_call.1} parent=99 // pred_fallthru
          _
      $region100: #{tpu_custom_call.1} parent=5 // pred_fallthru
        _
      %p2249 = scmp.le.s32.totalorder 2, %s27
      // Predicated region
      $region117: #{tpu_custom_call.1} parent=5 // pred_check
        %p2250 = pneg %p2249
      $region118: #{tpu_custom_call.1} parent=5 // pred_check_branch
        %2252 = sbr.rel (%p2250) target = $region120
      $region119: #{tpu_custom_call.1} parent=5 // pred_region
        %s2253 = ssub.s32 %s27, 2
      $region120: #{tpu_custom_call.1} parent=5 // pred_fallthru
        _
    $region6: #{tpu_custom_call.1} parent=1 // loop_footer
      %s31 = sadd.s32 1, %s27
    $region7: #{tpu_custom_call.1} parent=1 // loop_footer_branch
      %26 = sbr.rel target = $region3
    $region8: #{tpu_custom_call.1} parent=1 // loop_exit
      _
    %2254 = vsyncpa [#allocation4], 1
    %s2255 = scalar_lea.sflag [#allocation4], 1
    %2256 = vsyncpa %s2255, 1

</llo_original>
